<compile_context>
chip_gen: v5e
topology: v5e:2x2
jax: 0.10.0
libtpu: 0.0.40
codegen_flags: <defaults>
</compile_context>

<pallas_src>
import functools

import jax
import jax.numpy as jnp
from jax import lax
from jax.experimental import pallas as pl
from jax.experimental.pallas import tpu as pltpu


def _round_up(x, m):
    return ((x + m - 1) // m) * m


def gru_kernel(x_ref, w_ih_ref, w_hh_ref, bias_ref, bhn_ref,
               out_ref, hn_ref, h_scratch, gi_scratch, *, g_sub):
    # Shapes (Hp = hidden padded to a 128-lane multiple, Bt = batch tile):
    #   x_ref:      (t_chunk, Bt, I)
    #   w_ih_ref:   (I,  3*Hp)  gates r|z|n, each in its own Hp-wide lane band
    #   w_hh_ref:   (Hp, 3*Hp)
    #   bias_ref:   (1, 3*Hp)   b_ih + [b_hr, b_hz, 0]   (lane-padded)
    #   bhn_ref:    (1, Hp)     b_hn (must stay under the r gate)
    #   out_ref:    (t_chunk, Bt, Hp)
    #   hn_ref:     (Bt, Hp)
    #   h_scratch:  (Bt, Hp)  f32       carried hidden state across time chunks
    #   gi_scratch: (t_chunk, Bt, 3*Hp) f32   precomputed input projections
    c = pl.program_id(1)
    nc = pl.num_programs(1)

    @pl.when(c == 0)
    def _():
        h_scratch[...] = jnp.zeros_like(h_scratch)

    Hp = w_hh_ref.shape[0]
    Bt = h_scratch.shape[0]
    T = x_ref.shape[0]
    I = x_ref.shape[2]
    n_sub = T // g_sub
    mm_dtype = w_ih_ref.dtype

    # Hoist loop-invariant loads out of the recurrence.
    w_ih = w_ih_ref[...]
    w_hh = w_hh_ref[...]
    bias = bias_ref[...]
    b_hn = bhn_ref[...]

    def project(sb):
        # Input projection for one sub-block of g_sub steps: a single
        # (g_sub*Bt, I) x (I, 3Hp) MXU matmul with the foldable biases included.
        # Independent of the recurrence (h), so it can overlap with it.
        row = sb * g_sub
        x_blk = x_ref[pl.ds(row, g_sub), :, :].astype(mm_dtype)
        gi = jnp.dot(x_blk.reshape(g_sub * Bt, I), w_ih,
                     preferred_element_type=jnp.float32) + bias
        gi_scratch[pl.ds(row, g_sub)] = gi.reshape(g_sub, Bt, 3 * Hp)

    project(0)

    def sub_block(sb, h):
        # Issue the NEXT sub-block's input projection before this sub-block's
        # recurrence so the MXU work can hide behind the latency-bound chain.
        @pl.when(sb + 1 < n_sub)
        def _():
            project(sb + 1)

        def step(i, h):
            t = sb * g_sub + i
            gi_t = gi_scratch[t]                                    # (Bt, 3Hp)
            gh = jnp.dot(h.astype(w_hh.dtype), w_hh,
                         preferred_element_type=jnp.float32)        # (Bt, 3Hp)
            # Fused r/z sigmoid over one lane-aligned (Bt, 2Hp) slice.
            rz = jax.nn.sigmoid(gi_t[:, :2 * Hp] + gh[:, :2 * Hp])
            r = rz[:, :Hp]
            z = rz[:, Hp:]
            n = jnp.tanh(gi_t[:, 2 * Hp:] + r * (gh[:, 2 * Hp:] + b_hn))
            h_new = n + z * (h - n)
            out_ref[t] = h_new.astype(out_ref.dtype)                # lane-dense
            return h_new

        # Bounded unroll: keeps LLO scheduling visibility without vreg spills.
        return lax.fori_loop(0, g_sub, step, h, unroll=True)

    h_final = lax.fori_loop(0, n_sub, sub_block, h_scratch[...])

    @pl.when(c < nc - 1)
    def _():
        h_scratch[...] = h_final

    @pl.when(c == nc - 1)
    def _():
        hn_ref[...] = h_final.astype(hn_ref.dtype)


def gru_forward(x, w_ih, w_hh, b_ih, b_hh, *, t_chunk=None, b_tile=None,
                unroll=8, matmul_dtype=jnp.float32):
    """Single-layer GRU, zero initial hidden state (PyTorch nn.GRU defaults).

    x:    (S, B, I) float32, time-major (batch_first=False).
    w_ih: (3H, I) = gru.weight_ih_l0 (gate order r, z, n)
    w_hh: (3H, H) = gru.weight_hh_l0
    b_ih: (3H,)   = gru.bias_ih_l0
    b_hh: (3H,)   = gru.bias_hh_l0
    Returns (output (S, B, H), h_n (B, H)); the module's forward() is `output`.
    """
    S, B, I = x.shape
    H = w_hh.shape[1]
    assert w_ih.shape == (3 * H, I) and w_hh.shape == (3 * H, H)
    out_dtype = x.dtype
    f32 = jnp.float32

    # --- padding: batch to sublane multiple (8), hidden to lane multiple (128).
    Bp = _round_up(B, 8)
    Hp = _round_up(H, 128)
    if Bp != B:
        x = jnp.pad(x, ((0, 0), (0, Bp - B), (0, 0)))

    if b_tile is None:
        # One batch tile by default.  Set e.g. b_tile = Bp // 2 (multiple of 8)
        # to shard independent per-batch recurrences across v7x's 2 TensorCores.
        b_tile = Bp
    assert Bp % b_tile == 0 and b_tile % 8 == 0
    nb = Bp // b_tile

    # Gate-banded, lane-padded, transposed weights (contraction dim first).
    w_ih_t = jnp.zeros((I, 3 * Hp), f32)
    w_hh_t = jnp.zeros((Hp, 3 * Hp), f32)
    bias_fold = jnp.zeros((1, 3 * Hp), f32)
    for g in range(3):
        w_ih_t = w_ih_t.at[:, g * Hp:g * Hp + H].set(
            jnp.transpose(w_ih[g * H:(g + 1) * H, :]).astype(f32))
        w_hh_t = w_hh_t.at[:H, g * Hp:g * Hp + H].set(
            jnp.transpose(w_hh[g * H:(g + 1) * H, :]).astype(f32))
    # Fold b_ir+b_hr, b_iz+b_hz, b_in into the input projection; keep b_hn
    # separate (it is gated by r).
    bias_fold = bias_fold.at[0, 0:H].set((b_ih[0:H] + b_hh[0:H]).astype(f32))
    bias_fold = bias_fold.at[0, Hp:Hp + H].set(
        (b_ih[H:2 * H] + b_hh[H:2 * H]).astype(f32))
    bias_fold = bias_fold.at[0, 2 * Hp:2 * Hp + H].set(b_ih[2 * H:3 * H].astype(f32))
    b_hn = jnp.zeros((1, Hp), f32).at[0, :H].set(b_hh[2 * H:3 * H].astype(f32))

    # Optional bf16 matmul operands (f32 accumulation, f32 carried h).
    w_ih_t = w_ih_t.astype(matmul_dtype)
    w_hh_t = w_hh_t.astype(matmul_dtype)
    x_in = x.astype(matmul_dtype)

    # --- time-chunk sizing against a conservative VMEM budget (v7x-safe).
    item = jnp.dtype(matmul_dtype).itemsize
    lanes_I = _round_up(I, 128)
    # Per-timestep dynamic VMEM: gi_scratch + 2x-buffered x block + 2x out block.
    per_t = b_tile * (3 * Hp * 4 + 2 * lanes_I * item + 2 * Hp * 4)
    fixed = ((w_ih_t.size + w_hh_t.size) * item * 2
             + (bias_fold.size + b_hn.size) * 4 * 2
             + b_tile * Hp * 4 * 3          # h_scratch + double-buffered hn
             + (1 << 20))                   # headroom
    budget = 24 * 1024 * 1024
    if t_chunk is None:
        max_t = max(1, (budget - fixed) // per_t)
        t_chunk = 1
        for d in range(1, S + 1):
            if S % d == 0 and d <= max_t:
                t_chunk = d
    assert S % t_chunk == 0
    n_chunks = S // t_chunk

    # Bounded unroll: largest divisor of t_chunk not exceeding `unroll`.
    g_sub = 1
    for d in range(1, min(unroll, t_chunk) + 1):
        if t_chunk % d == 0:
            g_sub = d

    est_vmem = fixed + per_t * t_chunk
    vmem_limit = int(min(64 * 1024 * 1024, max(16 * 1024 * 1024, 2 * est_vmem)))

    kernel = functools.partial(gru_kernel, g_sub=g_sub)

    out, h_n = pl.pallas_call(
        kernel,
        out_shape=(
            jax.ShapeDtypeStruct((S, Bp, Hp), out_dtype),
            jax.ShapeDtypeStruct((Bp, Hp), out_dtype),
        ),
        grid_spec=pltpu.PrefetchScalarGridSpec(
            num_scalar_prefetch=0,
            grid=(nb, n_chunks),
            in_specs=[
                pl.BlockSpec((t_chunk, b_tile, I), lambda bt, c: (c, bt, 0)),
                # TODO(synk): the four operands below have constant index maps;
                # single-buffer them (pipeline_mode=pl.Buffered(1)) if VMEM
                # ever gets tight — here they are small enough not to matter.
                pl.BlockSpec((I, 3 * Hp), lambda bt, c: (0, 0)),
                pl.BlockSpec((Hp, 3 * Hp), lambda bt, c: (0, 0)),
                pl.BlockSpec((1, 3 * Hp), lambda bt, c: (0, 0)),
                pl.BlockSpec((1, Hp), lambda bt, c: (0, 0)),
            ],
            out_specs=(
                pl.BlockSpec((t_chunk, b_tile, Hp), lambda bt, c: (c, bt, 0)),
                pl.BlockSpec((b_tile, Hp), lambda bt, c: (bt, 0)),
            ),
            scratch_shapes=[
                pltpu.VMEM((b_tile, Hp), jnp.float32),               # carried h
                pltpu.VMEM((t_chunk, b_tile, 3 * Hp), jnp.float32),  # input proj
            ],
        ),
        compiler_params=pltpu.CompilerParams(
            # Batch tiles are independent -> parallel; time is sequential.
            dimension_semantics=("parallel", "arbitrary"),
            vmem_limit_bytes=vmem_limit,
        ),
    )(x_in, w_ih_t, w_hh_t, bias_fold, b_hn)

    return out[:, :B, :H], h_n[:B, :H]


def gru_reference(x, w_ih, w_hh, b_ih, b_hh):
    """Pure-JAX reference (PyTorch nn.GRU math) for the correctness check."""
    S, B, I = x.shape
    H = w_hh.shape[1]

    def step(h, x_t):
        gi = x_t @ w_ih.T + b_ih            # (B, 3H)
        gh = h @ w_hh.T + b_hh              # (B, 3H)
        r = jax.nn.sigmoid(gi[:, :H] + gh[:, :H])
        z = jax.nn.sigmoid(gi[:, H:2 * H] + gh[:, H:2 * H])
        n = jnp.tanh(gi[:, 2 * H:] + r * gh[:, 2 * H:])
        h_new = (1.0 - z) * n + z * h
        return h_new, h_new

    h0 = jnp.zeros((B, H), jnp.float32)
    h_n, ys = lax.scan(step, h0, x)
    return ys, h_n


if __name__ == "__main__":
    SEQ, BATCH, INPUT, HIDDEN = 8, 4, 16, 32

    key = jax.random.PRNGKey(0)
    k_x, k_wih, k_whh, k_bih, k_bhh = jax.random.split(key, 5)

    # PyTorch nn.GRU init: uniform(-1/sqrt(H), 1/sqrt(H)) for all params.
    bound = 1.0 / (HIDDEN ** 0.5)
    x = jax.random.normal(k_x, (SEQ, BATCH, INPUT), jnp.float32)
    w_ih = jax.random.uniform(k_wih, (3 * HIDDEN, INPUT), jnp.float32, -bound, bound)
    w_hh = jax.random.uniform(k_whh, (3 * HIDDEN, HIDDEN), jnp.float32, -bound, bound)
    b_ih = jax.random.uniform(k_bih, (3 * HIDDEN,), jnp.float32, -bound, bound)
    b_hh = jax.random.uniform(k_bhh, (3 * HIDDEN,), jnp.float32, -bound, bound)

    out, h_n = gru_forward(x, w_ih, w_hh, b_ih, b_hh)
    out = jax.block_until_ready(out)
    h_n = jax.block_until_ready(h_n)

    ref_out, ref_hn = gru_reference(x, w_ih, w_hh, b_ih, b_hh)
    ref_out = jax.block_until_ready(ref_out)

    assert out.shape == (SEQ, BATCH, HIDDEN)
    assert h_n.shape == (BATCH, HIDDEN)
    assert jnp.allclose(out, ref_out, atol=1e-4, rtol=1e-4), "output mismatch vs JAX reference"
    assert jnp.allclose(h_n, ref_hn, atol=1e-4, rtol=1e-4), "h_n mismatch vs JAX reference"

    print("KERNEL_OK")
</pallas_src>

<mosaic_0001>
module attributes {stable_mosaic.version = 11 : i64} {
  func.func @gru_kernel(%arg0: i32, %arg1: i32, %arg2: memref<8x8x16xf32, #tpu.memory_space<vmem>>, %arg3: memref<16x384xf32, #tpu.memory_space<vmem>>, %arg4: memref<128x384xf32, #tpu.memory_space<vmem>>, %arg5: memref<1x384xf32, #tpu.memory_space<vmem>>, %arg6: memref<1x128xf32, #tpu.memory_space<vmem>>, %arg7: memref<8x8x128xf32, #tpu.memory_space<vmem>>, %arg8: memref<8x128xf32, #tpu.memory_space<vmem>>, %arg9: memref<8x128xf32, #tpu.memory_space<vmem>>, %arg10: memref<8x8x384xf32, #tpu.memory_space<vmem>>) attributes {dimension_semantics = [#tpu.dimension_semantics<parallel>, #tpu.dimension_semantics<arbitrary>], iteration_bounds = array<i64: 1, 1>, scalar_prefetch = 0 : i64, scratch_operands = 2 : i64, tpu.core_type = #tpu.core_type<tc>, window_params = [{transform_indices = @transform_0, window_bounds = array<i64: 8, 8, 16>}, {pipeline_mode = #tpu.pipeline_mode<synchronous>, transform_indices = @transform_1, window_bounds = array<i64: 16, 384>}, {pipeline_mode = #tpu.pipeline_mode<synchronous>, transform_indices = @transform_2, window_bounds = array<i64: 128, 384>}, {pipeline_mode = #tpu.pipeline_mode<synchronous>, transform_indices = @transform_3, window_bounds = array<i64: 1, 384>}, {pipeline_mode = #tpu.pipeline_mode<synchronous>, transform_indices = @transform_4, window_bounds = array<i64: 1, 128>}, {transform_indices = @transform_5, window_bounds = array<i64: 8, 8, 128>}, {transform_indices = @transform_6, window_bounds = array<i64: 8, 128>}]} {
    %c0_i32 = arith.constant 0 : i32
    %0 = arith.cmpi eq, %arg1, %c0_i32 : i32
    %1 = arith.extui %0 : i1 to i32
    %c0_i32_0 = arith.constant 0 : i32
    %2 = arith.cmpi ne, %1, %c0_i32_0 : i32
    scf.if %2 {
      %cst_82 = arith.constant 0.000000e+00 : f32
      %265 = vector.broadcast %cst_82 : f32 to vector<8x128xf32>
      %c0_83 = arith.constant 0 : index
      %c0_84 = arith.constant 0 : index
      %266 = vector.load %arg9[%c0_83, %c0_84] : memref<8x128xf32, #tpu.memory_space<vmem>>, vector<8x128xf32>
      tpu.vector_store %arg9[%c0_83, %c0_84], %265 {strides = array<i32>} : memref<8x128xf32, #tpu.memory_space<vmem>>, vector<8x128xf32>,
    } else {
    }
    %c0 = arith.constant 0 : index
    %c0_1 = arith.constant 0 : index
    %3 = vector.load %arg3[%c0, %c0_1] : memref<16x384xf32, #tpu.memory_space<vmem>>, vector<16x384xf32>
    %c0_2 = arith.constant 0 : index
    %c0_3 = arith.constant 0 : index
    %4 = vector.load %arg4[%c0_2, %c0_3] : memref<128x384xf32, #tpu.memory_space<vmem>>, vector<128x384xf32>
    %c0_4 = arith.constant 0 : index
    %c0_5 = arith.constant 0 : index
    %5 = vector.load %arg5[%c0_4, %c0_5] : memref<1x384xf32, #tpu.memory_space<vmem>>, vector<1x384xf32>
    %c0_6 = arith.constant 0 : index
    %c0_7 = arith.constant 0 : index
    %6 = vector.load %arg6[%c0_6, %c0_7] : memref<1x128xf32, #tpu.memory_space<vmem>>, vector<1x128xf32>
    %c0_8 = arith.constant 0 : index
    %c0_9 = arith.constant 0 : index
    %c0_10 = arith.constant 0 : index
    %7 = vector.load %arg2[%c0_8, %c0_9, %c0_10] : memref<8x8x16xf32, #tpu.memory_space<vmem>>, vector<8x8x16xf32>
    %8 = vector.shape_cast %7 : vector<8x8x16xf32> to vector<64x16xf32>
    %cst = arith.constant dense<0.000000e+00> : vector<64x384xf32>
    %9 = tpu.matmul %8, %3, %cst {dimension_numbers = #tpu.dot_dimension_numbers<[1], [0], [0], [1], [0, 0, 1, 1], [], []>} : vector<64x16xf32>, vector<16x384xf32>, vector<64x384xf32> -> vector<64x384xf32>
    %10 = vector.broadcast %5 : vector<1x384xf32> to vector<64x384xf32>
    %11 = arith.addf %9, %10 : vector<64x384xf32>
    %12 = vector.shape_cast %11 : vector<64x384xf32> to vector<8x8x384xf32>
    %c0_11 = arith.constant 0 : index
    %c0_12 = arith.constant 0 : index
    %c0_13 = arith.constant 0 : index
    %13 = vector.load %arg10[%c0_11, %c0_12, %c0_13] : memref<8x8x384xf32, #tpu.memory_space<vmem>>, vector<8x8x384xf32>
    tpu.vector_store %arg10[%c0_11, %c0_12, %c0_13], %12 {strides = array<i32>} : memref<8x8x384xf32, #tpu.memory_space<vmem>>, vector<8x8x384xf32>,
    %c0_14 = arith.constant 0 : index
    %c0_15 = arith.constant 0 : index
    %14 = vector.load %arg9[%c0_14, %c0_15] : memref<8x128xf32, #tpu.memory_space<vmem>>, vector<8x128xf32>
    %c0_i32_16 = arith.constant 0 : i32
    %c1_i32 = arith.constant 1 : i32
    %15 = arith.addi %c0_i32_16, %c1_i32 : i32
    %c1_i32_17 = arith.constant 1 : i32
    %16 = arith.cmpi slt, %15, %c1_i32_17 : i32
    %17 = arith.extui %16 : i1 to i32
    %c0_i32_18 = arith.constant 0 : i32
    %18 = arith.cmpi ne, %17, %c0_i32_18 : i32
    scf.if %18 {
      %c1_i32_82 = arith.constant 1 : i32
      %265 = arith.addi %c0_i32_16, %c1_i32_82 : i32
      %c8_i32_83 = arith.constant 8 : i32
      %266 = arith.muli %265, %c8_i32_83 : i32
      %267 = arith.index_cast %266 : i32 to index
      %c0_84 = arith.constant 0 : index
      %c0_85 = arith.constant 0 : index
      %268 = vector.load %arg2[%267, %c0_84, %c0_85] : memref<8x8x16xf32, #tpu.memory_space<vmem>>, vector<8x8x16xf32>
      %269 = vector.shape_cast %268 : vector<8x8x16xf32> to vector<64x16xf32>
      %cst_86 = arith.constant dense<0.000000e+00> : vector<64x384xf32>
      %270 = tpu.matmul %269, %3, %cst_86 {dimension_numbers = #tpu.dot_dimension_numbers<[1], [0], [0], [1], [0, 0, 1, 1], [], []>} : vector<64x16xf32>, vector<16x384xf32>, vector<64x384xf32> -> vector<64x384xf32>
      %271 = vector.broadcast %5 : vector<1x384xf32> to vector<64x384xf32>
      %272 = arith.addf %270, %271 : vector<64x384xf32>
      %273 = vector.shape_cast %272 : vector<64x384xf32> to vector<8x8x384xf32>
      %274 = arith.index_cast %266 : i32 to index
      %c0_87 = arith.constant 0 : index
      %c0_88 = arith.constant 0 : index
      %275 = vector.load %arg10[%274, %c0_87, %c0_88] : memref<8x8x384xf32, #tpu.memory_space<vmem>>, vector<8x8x384xf32>
      tpu.vector_store %arg10[%274, %c0_87, %c0_88], %273 {strides = array<i32>} : memref<8x8x384xf32, #tpu.memory_space<vmem>>, vector<8x8x384xf32>,
    } else {
    }
    %c0_i32_19 = arith.constant 0 : i32
    %c8_i32 = arith.constant 8 : i32
    %19 = arith.muli %c0_i32_16, %c8_i32 : i32
    %20 = arith.addi %19, %c0_i32_19 : i32
    %21 = arith.index_cast %20 : i32 to index
    %c0_20 = arith.constant 0 : index
    %c0_21 = arith.constant 0 : index
    %22 = vector.load %arg10[%21, %c0_20, %c0_21] : memref<8x8x384xf32, #tpu.memory_space<vmem>>, vector<1x8x384xf32>
    %23 = vector.shape_cast %22 : vector<1x8x384xf32> to vector<8x384xf32>
    %cst_22 = arith.constant dense<0.000000e+00> : vector<8x384xf32>
    %24 = tpu.matmul %14, %4, %cst_22 {dimension_numbers = #tpu.dot_dimension_numbers<[1], [0], [0], [1], [0, 0, 1, 1], [], []>} : vector<8x128xf32>, vector<128x384xf32>, vector<8x384xf32> -> vector<8x384xf32>
    %25 = vector.extract_strided_slice %23 {offsets = [0, 0], sizes = [8, 256], strides = [1, 1]} : vector<8x384xf32> to vector<8x256xf32>
    %26 = vector.extract_strided_slice %24 {offsets = [0, 0], sizes = [8, 256], strides = [1, 1]} : vector<8x384xf32> to vector<8x256xf32>
    %27 = arith.addf %25, %26 : vector<8x256xf32>
    %28 = arith.negf %27 : vector<8x256xf32>
    %29 = math.exp %28 : vector<8x256xf32>
    %cst_23 = arith.constant 1.000000e+00 : f32
    %30 = vector.broadcast %cst_23 : f32 to vector<8x256xf32>
    %31 = arith.addf %30, %29 : vector<8x256xf32>
    %32 = arith.divf %30, %31 : vector<8x256xf32>
    %33 = vector.extract_strided_slice %32 {offsets = [0, 0], sizes = [8, 128], strides = [1, 1]} : vector<8x256xf32> to vector<8x128xf32>
    %34 = vector.extract_strided_slice %32 {offsets = [0, 128], sizes = [8, 128], strides = [1, 1]} : vector<8x256xf32> to vector<8x128xf32>
    %35 = vector.extract_strided_slice %23 {offsets = [0, 256], sizes = [8, 128], strides = [1, 1]} : vector<8x384xf32> to vector<8x128xf32>
    %36 = vector.extract_strided_slice %24 {offsets = [0, 256], sizes = [8, 128], strides = [1, 1]} : vector<8x384xf32> to vector<8x128xf32>
    %37 = vector.broadcast %6 : vector<1x128xf32> to vector<8x128xf32>
    %38 = arith.addf %36, %37 : vector<8x128xf32>
    %39 = arith.mulf %33, %38 : vector<8x128xf32>
    %40 = arith.addf %35, %39 : vector<8x128xf32>
    %41 = math.tanh %40 : vector<8x128xf32>
    %42 = arith.subf %14, %41 : vector<8x128xf32>
    %43 = arith.mulf %34, %42 : vector<8x128xf32>
    %44 = arith.addf %41, %43 : vector<8x128xf32>
    %45 = arith.index_cast %20 : i32 to index
    %c0_24 = arith.constant 0 : index
    %c0_25 = arith.constant 0 : index
    %46 = vector.load %arg7[%45, %c0_24, %c0_25] : memref<8x8x128xf32, #tpu.memory_space<vmem>>, vector<1x8x128xf32>
    %47 = vector.shape_cast %46 : vector<1x8x128xf32> to vector<8x128xf32>
    %48 = vector.shape_cast %44 : vector<8x128xf32> to vector<1x8x128xf32>
    tpu.vector_store %arg7[%45, %c0_24, %c0_25], %48 {strides = array<i32>} : memref<8x8x128xf32, #tpu.memory_space<vmem>>, vector<1x8x128xf32>,
    %c1_i32_26 = arith.constant 1 : i32
    %c8_i32_27 = arith.constant 8 : i32
    %49 = arith.muli %c0_i32_16, %c8_i32_27 : i32
    %50 = arith.addi %49, %c1_i32_26 : i32
    %51 = arith.index_cast %50 : i32 to index
    %c0_28 = arith.constant 0 : index
    %c0_29 = arith.constant 0 : index
    %52 = vector.load %arg10[%51, %c0_28, %c0_29] : memref<8x8x384xf32, #tpu.memory_space<vmem>>, vector<1x8x384xf32>
    %53 = vector.shape_cast %52 : vector<1x8x384xf32> to vector<8x384xf32>
    %cst_30 = arith.constant dense<0.000000e+00> : vector<8x384xf32>
    %54 = tpu.matmul %44, %4, %cst_30 {dimension_numbers = #tpu.dot_dimension_numbers<[1], [0], [0], [1], [0, 0, 1, 1], [], []>} : vector<8x128xf32>, vector<128x384xf32>, vector<8x384xf32> -> vector<8x384xf32>
    %55 = vector.extract_strided_slice %53 {offsets = [0, 0], sizes = [8, 256], strides = [1, 1]} : vector<8x384xf32> to vector<8x256xf32>
    %56 = vector.extract_strided_slice %54 {offsets = [0, 0], sizes = [8, 256], strides = [1, 1]} : vector<8x384xf32> to vector<8x256xf32>
    %57 = arith.addf %55, %56 : vector<8x256xf32>
    %58 = arith.negf %57 : vector<8x256xf32>
    %59 = math.exp %58 : vector<8x256xf32>
    %cst_31 = arith.constant 1.000000e+00 : f32
    %60 = vector.broadcast %cst_31 : f32 to vector<8x256xf32>
    %61 = arith.addf %60, %59 : vector<8x256xf32>
    %62 = arith.divf %60, %61 : vector<8x256xf32>
    %63 = vector.extract_strided_slice %62 {offsets = [0, 0], sizes = [8, 128], strides = [1, 1]} : vector<8x256xf32> to vector<8x128xf32>
    %64 = vector.extract_strided_slice %62 {offsets = [0, 128], sizes = [8, 128], strides = [1, 1]} : vector<8x256xf32> to vector<8x128xf32>
    %65 = vector.extract_strided_slice %53 {offsets = [0, 256], sizes = [8, 128], strides = [1, 1]} : vector<8x384xf32> to vector<8x128xf32>
    %66 = vector.extract_strided_slice %54 {offsets = [0, 256], sizes = [8, 128], strides = [1, 1]} : vector<8x384xf32> to vector<8x128xf32>
    %67 = vector.broadcast %6 : vector<1x128xf32> to vector<8x128xf32>
    %68 = arith.addf %66, %67 : vector<8x128xf32>
    %69 = arith.mulf %63, %68 : vector<8x128xf32>
    %70 = arith.addf %65, %69 : vector<8x128xf32>
    %71 = math.tanh %70 : vector<8x128xf32>
    %72 = arith.subf %44, %71 : vector<8x128xf32>
    %73 = arith.mulf %64, %72 : vector<8x128xf32>
    %74 = arith.addf %71, %73 : vector<8x128xf32>
    %75 = arith.index_cast %50 : i32 to index
    %c0_32 = arith.constant 0 : index
    %c0_33 = arith.constant 0 : index
    %76 = vector.load %arg7[%75, %c0_32, %c0_33] : memref<8x8x128xf32, #tpu.memory_space<vmem>>, vector<1x8x128xf32>
    %77 = vector.shape_cast %76 : vector<1x8x128xf32> to vector<8x128xf32>
    %78 = vector.shape_cast %74 : vector<8x128xf32> to vector<1x8x128xf32>
    tpu.vector_store %arg7[%75, %c0_32, %c0_33], %78 {strides = array<i32>} : memref<8x8x128xf32, #tpu.memory_space<vmem>>, vector<1x8x128xf32>,
    %c2_i32 = arith.constant 2 : i32
    %c8_i32_34 = arith.constant 8 : i32
    %79 = arith.muli %c0_i32_16, %c8_i32_34 : i32
    %80 = arith.addi %79, %c2_i32 : i32
    %81 = arith.index_cast %80 : i32 to index
    %c0_35 = arith.constant 0 : index
    %c0_36 = arith.constant 0 : index
    %82 = vector.load %arg10[%81, %c0_35, %c0_36] : memref<8x8x384xf32, #tpu.memory_space<vmem>>, vector<1x8x384xf32>
    %83 = vector.shape_cast %82 : vector<1x8x384xf32> to vector<8x384xf32>
    %cst_37 = arith.constant dense<0.000000e+00> : vector<8x384xf32>
    %84 = tpu.matmul %74, %4, %cst_37 {dimension_numbers = #tpu.dot_dimension_numbers<[1], [0], [0], [1], [0, 0, 1, 1], [], []>} : vector<8x128xf32>, vector<128x384xf32>, vector<8x384xf32> -> vector<8x384xf32>
    %85 = vector.extract_strided_slice %83 {offsets = [0, 0], sizes = [8, 256], strides = [1, 1]} : vector<8x384xf32> to vector<8x256xf32>
    %86 = vector.extract_strided_slice %84 {offsets = [0, 0], sizes = [8, 256], strides = [1, 1]} : vector<8x384xf32> to vector<8x256xf32>
    %87 = arith.addf %85, %86 : vector<8x256xf32>
    %88 = arith.negf %87 : vector<8x256xf32>
    %89 = math.exp %88 : vector<8x256xf32>
    %cst_38 = arith.constant 1.000000e+00 : f32
    %90 = vector.broadcast %cst_38 : f32 to vector<8x256xf32>
    %91 = arith.addf %90, %89 : vector<8x256xf32>
    %92 = arith.divf %90, %91 : vector<8x256xf32>
    %93 = vector.extract_strided_slice %92 {offsets = [0, 0], sizes = [8, 128], strides = [1, 1]} : vector<8x256xf32> to vector<8x128xf32>
    %94 = vector.extract_strided_slice %92 {offsets = [0, 128], sizes = [8, 128], strides = [1, 1]} : vector<8x256xf32> to vector<8x128xf32>
    %95 = vector.extract_strided_slice %83 {offsets = [0, 256], sizes = [8, 128], strides = [1, 1]} : vector<8x384xf32> to vector<8x128xf32>
    %96 = vector.extract_strided_slice %84 {offsets = [0, 256], sizes = [8, 128], strides = [1, 1]} : vector<8x384xf32> to vector<8x128xf32>
    %97 = vector.broadcast %6 : vector<1x128xf32> to vector<8x128xf32>
    %98 = arith.addf %96, %97 : vector<8x128xf32>
    %99 = arith.mulf %93, %98 : vector<8x128xf32>
    %100 = arith.addf %95, %99 : vector<8x128xf32>
    %101 = math.tanh %100 : vector<8x128xf32>
    %102 = arith.subf %74, %101 : vector<8x128xf32>
    %103 = arith.mulf %94, %102 : vector<8x128xf32>
    %104 = arith.addf %101, %103 : vector<8x128xf32>
    %105 = arith.index_cast %80 : i32 to index
    %c0_39 = arith.constant 0 : index
    %c0_40 = arith.constant 0 : index
    %106 = vector.load %arg7[%105, %c0_39, %c0_40] : memref<8x8x128xf32, #tpu.memory_space<vmem>>, vector<1x8x128xf32>
    %107 = vector.shape_cast %106 : vector<1x8x128xf32> to vector<8x128xf32>
    %108 = vector.shape_cast %104 : vector<8x128xf32> to vector<1x8x128xf32>
    tpu.vector_store %arg7[%105, %c0_39, %c0_40], %108 {strides = array<i32>} : memref<8x8x128xf32, #tpu.memory_space<vmem>>, vector<1x8x128xf32>,
    %c3_i32 = arith.constant 3 : i32
    %c8_i32_41 = arith.constant 8 : i32
    %109 = arith.muli %c0_i32_16, %c8_i32_41 : i32
    %110 = arith.addi %109, %c3_i32 : i32
    %111 = arith.index_cast %110 : i32 to index
    %c0_42 = arith.constant 0 : index
    %c0_43 = arith.constant 0 : index
    %112 = vector.load %arg10[%111, %c0_42, %c0_43] : memref<8x8x384xf32, #tpu.memory_space<vmem>>, vector<1x8x384xf32>
    %113 = vector.shape_cast %112 : vector<1x8x384xf32> to vector<8x384xf32>
    %cst_44 = arith.constant dense<0.000000e+00> : vector<8x384xf32>
    %114 = tpu.matmul %104, %4, %cst_44 {dimension_numbers = #tpu.dot_dimension_numbers<[1], [0], [0], [1], [0, 0, 1, 1], [], []>} : vector<8x128xf32>, vector<128x384xf32>, vector<8x384xf32> -> vector<8x384xf32>
    %115 = vector.extract_strided_slice %113 {offsets = [0, 0], sizes = [8, 256], strides = [1, 1]} : vector<8x384xf32> to vector<8x256xf32>
    %116 = vector.extract_strided_slice %114 {offsets = [0, 0], sizes = [8, 256], strides = [1, 1]} : vector<8x384xf32> to vector<8x256xf32>
    %117 = arith.addf %115, %116 : vector<8x256xf32>
    %118 = arith.negf %117 : vector<8x256xf32>
    %119 = math.exp %118 : vector<8x256xf32>
    %cst_45 = arith.constant 1.000000e+00 : f32
    %120 = vector.broadcast %cst_45 : f32 to vector<8x256xf32>
    %121 = arith.addf %120, %119 : vector<8x256xf32>
    %122 = arith.divf %120, %121 : vector<8x256xf32>
    %123 = vector.extract_strided_slice %122 {offsets = [0, 0], sizes = [8, 128], strides = [1, 1]} : vector<8x256xf32> to vector<8x128xf32>
    %124 = vector.extract_strided_slice %122 {offsets = [0, 128], sizes = [8, 128], strides = [1, 1]} : vector<8x256xf32> to vector<8x128xf32>
    %125 = vector.extract_strided_slice %113 {offsets = [0, 256], sizes = [8, 128], strides = [1, 1]} : vector<8x384xf32> to vector<8x128xf32>
    %126 = vector.extract_strided_slice %114 {offsets = [0, 256], sizes = [8, 128], strides = [1, 1]} : vector<8x384xf32> to vector<8x128xf32>
    %127 = vector.broadcast %6 : vector<1x128xf32> to vector<8x128xf32>
    %128 = arith.addf %126, %127 : vector<8x128xf32>
    %129 = arith.mulf %123, %128 : vector<8x128xf32>
    %130 = arith.addf %125, %129 : vector<8x128xf32>
    %131 = math.tanh %130 : vector<8x128xf32>
    %132 = arith.subf %104, %131 : vector<8x128xf32>
    %133 = arith.mulf %124, %132 : vector<8x128xf32>
    %134 = arith.addf %131, %133 : vector<8x128xf32>
    %135 = arith.index_cast %110 : i32 to index
    %c0_46 = arith.constant 0 : index
    %c0_47 = arith.constant 0 : index
    %136 = vector.load %arg7[%135, %c0_46, %c0_47] : memref<8x8x128xf32, #tpu.memory_space<vmem>>, vector<1x8x128xf32>
    %137 = vector.shape_cast %136 : vector<1x8x128xf32> to vector<8x128xf32>
    %138 = vector.shape_cast %134 : vector<8x128xf32> to vector<1x8x128xf32>
    tpu.vector_store %arg7[%135, %c0_46, %c0_47], %138 {strides = array<i32>} : memref<8x8x128xf32, #tpu.memory_space<vmem>>, vector<1x8x128xf32>,
    %c4_i32 = arith.constant 4 : i32
    %c8_i32_48 = arith.constant 8 : i32
    %139 = arith.muli %c0_i32_16, %c8_i32_48 : i32
    %140 = arith.addi %139, %c4_i32 : i32
    %141 = arith.index_cast %140 : i32 to index
    %c0_49 = arith.constant 0 : index
    %c0_50 = arith.constant 0 : index
    %142 = vector.load %arg10[%141, %c0_49, %c0_50] : memref<8x8x384xf32, #tpu.memory_space<vmem>>, vector<1x8x384xf32>
    %143 = vector.shape_cast %142 : vector<1x8x384xf32> to vector<8x384xf32>
    %cst_51 = arith.constant dense<0.000000e+00> : vector<8x384xf32>
    %144 = tpu.matmul %134, %4, %cst_51 {dimension_numbers = #tpu.dot_dimension_numbers<[1], [0], [0], [1], [0, 0, 1, 1], [], []>} : vector<8x128xf32>, vector<128x384xf32>, vector<8x384xf32> -> vector<8x384xf32>
    %145 = vector.extract_strided_slice %143 {offsets = [0, 0], sizes = [8, 256], strides = [1, 1]} : vector<8x384xf32> to vector<8x256xf32>
    %146 = vector.extract_strided_slice %144 {offsets = [0, 0], sizes = [8, 256], strides = [1, 1]} : vector<8x384xf32> to vector<8x256xf32>
    %147 = arith.addf %145, %146 : vector<8x256xf32>
    %148 = arith.negf %147 : vector<8x256xf32>
    %149 = math.exp %148 : vector<8x256xf32>
    %cst_52 = arith.constant 1.000000e+00 : f32
    %150 = vector.broadcast %cst_52 : f32 to vector<8x256xf32>
    %151 = arith.addf %150, %149 : vector<8x256xf32>
    %152 = arith.divf %150, %151 : vector<8x256xf32>
    %153 = vector.extract_strided_slice %152 {offsets = [0, 0], sizes = [8, 128], strides = [1, 1]} : vector<8x256xf32> to vector<8x128xf32>
    %154 = vector.extract_strided_slice %152 {offsets = [0, 128], sizes = [8, 128], strides = [1, 1]} : vector<8x256xf32> to vector<8x128xf32>
    %155 = vector.extract_strided_slice %143 {offsets = [0, 256], sizes = [8, 128], strides = [1, 1]} : vector<8x384xf32> to vector<8x128xf32>
    %156 = vector.extract_strided_slice %144 {offsets = [0, 256], sizes = [8, 128], strides = [1, 1]} : vector<8x384xf32> to vector<8x128xf32>
    %157 = vector.broadcast %6 : vector<1x128xf32> to vector<8x128xf32>
    %158 = arith.addf %156, %157 : vector<8x128xf32>
    %159 = arith.mulf %153, %158 : vector<8x128xf32>
    %160 = arith.addf %155, %159 : vector<8x128xf32>
    %161 = math.tanh %160 : vector<8x128xf32>
    %162 = arith.subf %134, %161 : vector<8x128xf32>
    %163 = arith.mulf %154, %162 : vector<8x128xf32>
    %164 = arith.addf %161, %163 : vector<8x128xf32>
    %165 = arith.index_cast %140 : i32 to index
    %c0_53 = arith.constant 0 : index
    %c0_54 = arith.constant 0 : index
    %166 = vector.load %arg7[%165, %c0_53, %c0_54] : memref<8x8x128xf32, #tpu.memory_space<vmem>>, vector<1x8x128xf32>
    %167 = vector.shape_cast %166 : vector<1x8x128xf32> to vector<8x128xf32>
    %168 = vector.shape_cast %164 : vector<8x128xf32> to vector<1x8x128xf32>
    tpu.vector_store %arg7[%165, %c0_53, %c0_54], %168 {strides = array<i32>} : memref<8x8x128xf32, #tpu.memory_space<vmem>>, vector<1x8x128xf32>,
    %c5_i32 = arith.constant 5 : i32
    %c8_i32_55 = arith.constant 8 : i32
    %169 = arith.muli %c0_i32_16, %c8_i32_55 : i32
    %170 = arith.addi %169, %c5_i32 : i32
    %171 = arith.index_cast %170 : i32 to index
    %c0_56 = arith.constant 0 : index
    %c0_57 = arith.constant 0 : index
    %172 = vector.load %arg10[%171, %c0_56, %c0_57] : memref<8x8x384xf32, #tpu.memory_space<vmem>>, vector<1x8x384xf32>
    %173 = vector.shape_cast %172 : vector<1x8x384xf32> to vector<8x384xf32>
    %cst_58 = arith.constant dense<0.000000e+00> : vector<8x384xf32>
    %174 = tpu.matmul %164, %4, %cst_58 {dimension_numbers = #tpu.dot_dimension_numbers<[1], [0], [0], [1], [0, 0, 1, 1], [], []>} : vector<8x128xf32>, vector<128x384xf32>, vector<8x384xf32> -> vector<8x384xf32>
    %175 = vector.extract_strided_slice %173 {offsets = [0, 0], sizes = [8, 256], strides = [1, 1]} : vector<8x384xf32> to vector<8x256xf32>
    %176 = vector.extract_strided_slice %174 {offsets = [0, 0], sizes = [8, 256], strides = [1, 1]} : vector<8x384xf32> to vector<8x256xf32>
    %177 = arith.addf %175, %176 : vector<8x256xf32>
    %178 = arith.negf %177 : vector<8x256xf32>
    %179 = math.exp %178 : vector<8x256xf32>
    %cst_59 = arith.constant 1.000000e+00 : f32
    %180 = vector.broadcast %cst_59 : f32 to vector<8x256xf32>
    %181 = arith.addf %180, %179 : vector<8x256xf32>
    %182 = arith.divf %180, %181 : vector<8x256xf32>
    %183 = vector.extract_strided_slice %182 {offsets = [0, 0], sizes = [8, 128], strides = [1, 1]} : vector<8x256xf32> to vector<8x128xf32>
    %184 = vector.extract_strided_slice %182 {offsets = [0, 128], sizes = [8, 128], strides = [1, 1]} : vector<8x256xf32> to vector<8x128xf32>
    %185 = vector.extract_strided_slice %173 {offsets = [0, 256], sizes = [8, 128], strides = [1, 1]} : vector<8x384xf32> to vector<8x128xf32>
    %186 = vector.extract_strided_slice %174 {offsets = [0, 256], sizes = [8, 128], strides = [1, 1]} : vector<8x384xf32> to vector<8x128xf32>
    %187 = vector.broadcast %6 : vector<1x128xf32> to vector<8x128xf32>
    %188 = arith.addf %186, %187 : vector<8x128xf32>
    %189 = arith.mulf %183, %188 : vector<8x128xf32>
    %190 = arith.addf %185, %189 : vector<8x128xf32>
    %191 = math.tanh %190 : vector<8x128xf32>
    %192 = arith.subf %164, %191 : vector<8x128xf32>
    %193 = arith.mulf %184, %192 : vector<8x128xf32>
    %194 = arith.addf %191, %193 : vector<8x128xf32>
    %195 = arith.index_cast %170 : i32 to index
    %c0_60 = arith.constant 0 : index
    %c0_61 = arith.constant 0 : index
    %196 = vector.load %arg7[%195, %c0_60, %c0_61] : memref<8x8x128xf32, #tpu.memory_space<vmem>>, vector<1x8x128xf32>
    %197 = vector.shape_cast %196 : vector<1x8x128xf32> to vector<8x128xf32>
    %198 = vector.shape_cast %194 : vector<8x128xf32> to vector<1x8x128xf32>
    tpu.vector_store %arg7[%195, %c0_60, %c0_61], %198 {strides = array<i32>} : memref<8x8x128xf32, #tpu.memory_space<vmem>>, vector<1x8x128xf32>,
    %c6_i32 = arith.constant 6 : i32
    %c8_i32_62 = arith.constant 8 : i32
    %199 = arith.muli %c0_i32_16, %c8_i32_62 : i32
    %200 = arith.addi %199, %c6_i32 : i32
    %201 = arith.index_cast %200 : i32 to index
    %c0_63 = arith.constant 0 : index
    %c0_64 = arith.constant 0 : index
    %202 = vector.load %arg10[%201, %c0_63, %c0_64] : memref<8x8x384xf32, #tpu.memory_space<vmem>>, vector<1x8x384xf32>
    %203 = vector.shape_cast %202 : vector<1x8x384xf32> to vector<8x384xf32>
    %cst_65 = arith.constant dense<0.000000e+00> : vector<8x384xf32>
    %204 = tpu.matmul %194, %4, %cst_65 {dimension_numbers = #tpu.dot_dimension_numbers<[1], [0], [0], [1], [0, 0, 1, 1], [], []>} : vector<8x128xf32>, vector<128x384xf32>, vector<8x384xf32> -> vector<8x384xf32>
    %205 = vector.extract_strided_slice %203 {offsets = [0, 0], sizes = [8, 256], strides = [1, 1]} : vector<8x384xf32> to vector<8x256xf32>
    %206 = vector.extract_strided_slice %204 {offsets = [0, 0], sizes = [8, 256], strides = [1, 1]} : vector<8x384xf32> to vector<8x256xf32>
    %207 = arith.addf %205, %206 : vector<8x256xf32>
    %208 = arith.negf %207 : vector<8x256xf32>
    %209 = math.exp %208 : vector<8x256xf32>
    %cst_66 = arith.constant 1.000000e+00 : f32
    %210 = vector.broadcast %cst_66 : f32 to vector<8x256xf32>
    %211 = arith.addf %210, %209 : vector<8x256xf32>
    %212 = arith.divf %210, %211 : vector<8x256xf32>
    %213 = vector.extract_strided_slice %212 {offsets = [0, 0], sizes = [8, 128], strides = [1, 1]} : vector<8x256xf32> to vector<8x128xf32>
    %214 = vector.extract_strided_slice %212 {offsets = [0, 128], sizes = [8, 128], strides = [1, 1]} : vector<8x256xf32> to vector<8x128xf32>
    %215 = vector.extract_strided_slice %203 {offsets = [0, 256], sizes = [8, 128], strides = [1, 1]} : vector<8x384xf32> to vector<8x128xf32>
    %216 = vector.extract_strided_slice %204 {offsets = [0, 256], sizes = [8, 128], strides = [1, 1]} : vector<8x384xf32> to vector<8x128xf32>
    %217 = vector.broadcast %6 : vector<1x128xf32> to vector<8x128xf32>
    %218 = arith.addf %216, %217 : vector<8x128xf32>
    %219 = arith.mulf %213, %218 : vector<8x128xf32>
    %220 = arith.addf %215, %219 : vector<8x128xf32>
    %221 = math.tanh %220 : vector<8x128xf32>
    %222 = arith.subf %194, %221 : vector<8x128xf32>
    %223 = arith.mulf %214, %222 : vector<8x128xf32>
    %224 = arith.addf %221, %223 : vector<8x128xf32>
    %225 = arith.index_cast %200 : i32 to index
    %c0_67 = arith.constant 0 : index
    %c0_68 = arith.constant 0 : index
    %226 = vector.load %arg7[%225, %c0_67, %c0_68] : memref<8x8x128xf32, #tpu.memory_space<vmem>>, vector<1x8x128xf32>
    %227 = vector.shape_cast %226 : vector<1x8x128xf32> to vector<8x128xf32>
    %228 = vector.shape_cast %224 : vector<8x128xf32> to vector<1x8x128xf32>
    tpu.vector_store %arg7[%225, %c0_67, %c0_68], %228 {strides = array<i32>} : memref<8x8x128xf32, #tpu.memory_space<vmem>>, vector<1x8x128xf32>,
    %c7_i32 = arith.constant 7 : i32
    %c8_i32_69 = arith.constant 8 : i32
    %229 = arith.muli %c0_i32_16, %c8_i32_69 : i32
    %230 = arith.addi %229, %c7_i32 : i32
    %231 = arith.index_cast %230 : i32 to index
    %c0_70 = arith.constant 0 : index
    %c0_71 = arith.constant 0 : index
    %232 = vector.load %arg10[%231, %c0_70, %c0_71] : memref<8x8x384xf32, #tpu.memory_space<vmem>>, vector<1x8x384xf32>
    %233 = vector.shape_cast %232 : vector<1x8x384xf32> to vector<8x384xf32>
    %cst_72 = arith.constant dense<0.000000e+00> : vector<8x384xf32>
    %234 = tpu.matmul %224, %4, %cst_72 {dimension_numbers = #tpu.dot_dimension_numbers<[1], [0], [0], [1], [0, 0, 1, 1], [], []>} : vector<8x128xf32>, vector<128x384xf32>, vector<8x384xf32> -> vector<8x384xf32>
    %235 = vector.extract_strided_slice %233 {offsets = [0, 0], sizes = [8, 256], strides = [1, 1]} : vector<8x384xf32> to vector<8x256xf32>
    %236 = vector.extract_strided_slice %234 {offsets = [0, 0], sizes = [8, 256], strides = [1, 1]} : vector<8x384xf32> to vector<8x256xf32>
    %237 = arith.addf %235, %236 : vector<8x256xf32>
    %238 = arith.negf %237 : vector<8x256xf32>
    %239 = math.exp %238 : vector<8x256xf32>
    %cst_73 = arith.constant 1.000000e+00 : f32
    %240 = vector.broadcast %cst_73 : f32 to vector<8x256xf32>
    %241 = arith.addf %240, %239 : vector<8x256xf32>
    %242 = arith.divf %240, %241 : vector<8x256xf32>
    %243 = vector.extract_strided_slice %242 {offsets = [0, 0], sizes = [8, 128], strides = [1, 1]} : vector<8x256xf32> to vector<8x128xf32>
    %244 = vector.extract_strided_slice %242 {offsets = [0, 128], sizes = [8, 128], strides = [1, 1]} : vector<8x256xf32> to vector<8x128xf32>
    %245 = vector.extract_strided_slice %233 {offsets = [0, 256], sizes = [8, 128], strides = [1, 1]} : vector<8x384xf32> to vector<8x128xf32>
    %246 = vector.extract_strided_slice %234 {offsets = [0, 256], sizes = [8, 128], strides = [1, 1]} : vector<8x384xf32> to vector<8x128xf32>
    %247 = vector.broadcast %6 : vector<1x128xf32> to vector<8x128xf32>
    %248 = arith.addf %246, %247 : vector<8x128xf32>
    %249 = arith.mulf %243, %248 : vector<8x128xf32>
    %250 = arith.addf %245, %249 : vector<8x128xf32>
    %251 = math.tanh %250 : vector<8x128xf32>
    %252 = arith.subf %224, %251 : vector<8x128xf32>
    %253 = arith.mulf %244, %252 : vector<8x128xf32>
    %254 = arith.addf %251, %253 : vector<8x128xf32>
    %255 = arith.index_cast %230 : i32 to index
    %c0_74 = arith.constant 0 : index
    %c0_75 = arith.constant 0 : index
    %256 = vector.load %arg7[%255, %c0_74, %c0_75] : memref<8x8x128xf32, #tpu.memory_space<vmem>>, vector<1x8x128xf32>
    %257 = vector.shape_cast %256 : vector<1x8x128xf32> to vector<8x128xf32>
    %258 = vector.shape_cast %254 : vector<8x128xf32> to vector<1x8x128xf32>
    tpu.vector_store %arg7[%255, %c0_74, %c0_75], %258 {strides = array<i32>} : memref<8x8x128xf32, #tpu.memory_space<vmem>>, vector<1x8x128xf32>,
    %c8_i32_76 = arith.constant 8 : i32
    %c1_i32_77 = arith.constant 1 : i32
    %c0_i32_78 = arith.constant 0 : i32
    %259 = arith.cmpi slt, %arg1, %c0_i32_78 : i32
    %260 = arith.extui %259 : i1 to i32
    %c0_i32_79 = arith.constant 0 : i32
    %261 = arith.cmpi ne, %260, %c0_i32_79 : i32
    scf.if %261 {
      %c0_82 = arith.constant 0 : index
      %c0_83 = arith.constant 0 : index
      %265 = vector.load %arg9[%c0_82, %c0_83] : memref<8x128xf32, #tpu.memory_space<vmem>>, vector<8x128xf32>
      tpu.vector_store %arg9[%c0_82, %c0_83], %254 {strides = array<i32>} : memref<8x128xf32, #tpu.memory_space<vmem>>, vector<8x128xf32>,
    } else {
    }
    %c0_i32_80 = arith.constant 0 : i32
    %262 = arith.cmpi eq, %arg1, %c0_i32_80 : i32
    %263 = arith.extui %262 : i1 to i32
    %c0_i32_81 = arith.constant 0 : i32
    %264 = arith.cmpi ne, %263, %c0_i32_81 : i32
    scf.if %264 {
      %c0_82 = arith.constant 0 : index
      %c0_83 = arith.constant 0 : index
      %265 = vector.load %arg8[%c0_82, %c0_83] : memref<8x128xf32, #tpu.memory_space<vmem>>, vector<8x128xf32>
      tpu.vector_store %arg8[%c0_82, %c0_83], %254 {strides = array<i32>} : memref<8x128xf32, #tpu.memory_space<vmem>>, vector<8x128xf32>,
    } else {
    }
    return
  }
  func.func @transform_0(%arg0: i32, %arg1: i32) -> (i32, i32, i32) {
    %c0_i32 = arith.constant 0 : i32
    %c0_i32_0 = arith.constant 0 : i32
    return %arg1, %arg0, %c0_i32 : i32, i32, i32
  }
  func.func @transform_1(%arg0: i32, %arg1: i32) -> (i32, i32) {
    %c0_i32 = arith.constant 0 : i32
    %c0_i32_0 = arith.constant 0 : i32
    %c0_i32_1 = arith.constant 0 : i32
    return %c0_i32, %c0_i32_0 : i32, i32
  }
  func.func @transform_2(%arg0: i32, %arg1: i32) -> (i32, i32) {
    %c0_i32 = arith.constant 0 : i32
    %c0_i32_0 = arith.constant 0 : i32
    %c0_i32_1 = arith.constant 0 : i32
    return %c0_i32, %c0_i32_0 : i32, i32
  }
  func.func @transform_3(%arg0: i32, %arg1: i32) -> (i32, i32) {
    %c0_i32 = arith.constant 0 : i32
    %c0_i32_0 = arith.constant 0 : i32
    %c0_i32_1 = arith.constant 0 : i32
    return %c0_i32, %c0_i32_0 : i32, i32
  }
  func.func @transform_4(%arg0: i32, %arg1: i32) -> (i32, i32) {
    %c0_i32 = arith.constant 0 : i32
    %c0_i32_0 = arith.constant 0 : i32
    %c0_i32_1 = arith.constant 0 : i32
    return %c0_i32, %c0_i32_0 : i32, i32
  }
  func.func @transform_5(%arg0: i32, %arg1: i32) -> (i32, i32, i32) {
    %c0_i32 = arith.constant 0 : i32
    %c0_i32_0 = arith.constant 0 : i32
    return %arg1, %arg0, %c0_i32 : i32, i32, i32
  }
  func.func @transform_6(%arg0: i32, %arg1: i32) -> (i32, i32) {
    %c0_i32 = arith.constant 0 : i32
    %c0_i32_0 = arith.constant 0 : i32
    return %arg0, %c0_i32 : i32, i32
  }
}

</mosaic_0001>

<llo_original>
// kernel: tpu_custom_call.1
$region0: #{tpu_custom_call.1}
  #allocation0 [shape = 'u32[]', space=smem, size = 0x4, offset = 0x4, fixed_abs, tag = 'smem constant byte address 0x4 - core index']
  #allocation1 [shape = 'u32[72,128]{1,0:T(1,128)}', space=vmem, size = 0x9000, scoped, tag = 'internal scratch']
  #allocation2 [shape = 'f32[8,128]{1,0:T(8,128)}', space=vmem, size = 0x1000, scoped, tag = 'scratch operand']
  #allocation3 [shape = 'f32[8,8,384]{2,1,0:T(8,128)}', space=vmem, size = 0x18000, scoped, tag = 'scratch operand']
  %s0 = inlined_call_operand.hbm [shape: f32[8,8,16], index: 0, kind: input, shape index: {}]
  %s1 = inlined_call_operand.hbm [shape: f32[16,384], index: 1, kind: input, shape index: {}]
  %s2 = inlined_call_operand.hbm [shape: f32[128,384], index: 2, kind: input, shape index: {}]
  %s3 = inlined_call_operand.hbm [shape: f32[1,384], index: 3, kind: input, shape index: {}]
  %s4 = inlined_call_operand.vmem [shape: f32[1,128], index: 4, kind: input, shape index: {}]
  %s5 = inlined_call_operand.hbm [shape: f32[8,8,128], index: 5, kind: output, shape index: {0}]
  %s6 = inlined_call_operand.hbm [shape: f32[8,128], index: 6, kind: output, shape index: {1}]
  %7 = xla_tuple %s5, %s6
  %s8 = sld [smem:[#allocation0]]
  $region66: #{tpu_custom_call.1} parent=0
    _
  %s10 = ssub.s32 1, %s8
  %s11 = scalar_select 0, %s10, %s8
  $region1: #{tpu_custom_call.1} parent=0
    #allocation4 [shape = 'u8[32768]{0}', space=vmem, size = 0x8000, scoped, tag = 'input window, operand 0, single buffered']
    #allocation5 [shape = 's32[1]{0}', space=sflag, size = 0x4, scoped, tag = 'scoped memory for tpu_custom_call.1']
    #allocation6 [shape = 's32[1]{0}', space=sflag, size = 0x4, scoped, tag = 'scoped memory for tpu_custom_call.1']
    #allocation7 [shape = 'u8[24576]{0}', space=vmem, size = 0x6000, scoped, tag = 'input window, operand 1, single buffered']
    #allocation8 [shape = 's32[1]{0}', space=sflag, size = 0x4, scoped, tag = 'scoped memory for tpu_custom_call.1']
    #allocation9 [shape = 'u8[196608]{0}', space=vmem, size = 0x30000, scoped, tag = 'input window, operand 2, single buffered']
    #allocation10 [shape = 'u8[1536]{0}', space=vmem, size = 0x800, scoped, tag = 'input window, operand 3, single buffered']
    #allocation11 [shape = 's32[1]{0}', space=sflag, size = 0x4, scoped, tag = 'scoped memory for tpu_custom_call.1']
    #allocation12 [shape = 'u8[32768]{0}', space=vmem, size = 0x8000, scoped, tag = 'output window, operand 0, single buffered']
    #allocation13 [shape = 'u8[4096]{0}', space=vmem, size = 0x1000, scoped, tag = 'output window, operand 1, single buffered']
    #allocation14 [shape = 's32[1]{0}', space=sflag, size = 0x4, scoped, tag = 'scoped memory for tpu_custom_call.1']
    %12 = vsyncpa [#allocation5], 0
    %13 = vsyncpa [#allocation8], 0
    %14 = vsyncpa [#allocation11], 0
    %15 = vsyncpa [#allocation6], 0
    %16 = vsyncpa [#allocation14], 0
    // Predicated region
    $region2: #{tpu_custom_call.1} parent=1 // pred_check
      _
    $region3: #{tpu_custom_call.1} parent=1 // pred_check_branch
      %18 = sbr.rel (0) target = $region5
    $region4: #{tpu_custom_call.1} parent=1 // pred_region
      %20 = vsyncadd [#allocation5], 0
      %s21 = sshll.u32 %s0, 4
      %s22 = int_to_ptr.hbm [resolvable:$true] %s21
      %s23 = sshll.u32 [#allocation4], 4
      %s24 = int_to_ptr.vmem [resolvable:$true] %s23
      %29 = dma.hbm_to_vmem [thread:$0]  %s22, 1024, %s24, [#allocation5], 128, 128, 8
    $region5: #{tpu_custom_call.1} parent=1 // pred_fallthru
      _
    // Predicated region
    $region6: #{tpu_custom_call.1} parent=1 // pred_check
      _
    $region7: #{tpu_custom_call.1} parent=1 // pred_check_branch
      %31 = sbr.rel (0) target = $region9
    $region8: #{tpu_custom_call.1} parent=1 // pred_region
      %33 = vsyncadd [#allocation8], 0
      %s34 = sshll.u32 %s1, 4
      %s35 = int_to_ptr.hbm [resolvable:$true] %s34
      %s36 = sshll.u32 [#allocation7], 4
      %s37 = int_to_ptr.vmem [resolvable:$true] %s36
      %42 = dma.hbm_to_vmem [thread:$0]  %s35, 768, %s37, [#allocation8], 384, 384, 24
    $region9: #{tpu_custom_call.1} parent=1 // pred_fallthru
      _
    // Predicated region
    $region10: #{tpu_custom_call.1} parent=1 // pred_check
      _
    $region11: #{tpu_custom_call.1} parent=1 // pred_check_branch
      %44 = sbr.rel (0) target = $region13
    $region12: #{tpu_custom_call.1} parent=1 // pred_region
      %46 = vsyncadd [#allocation8], 0
      %s47 = sshll.u32 %s2, 4
      %s48 = int_to_ptr.hbm [resolvable:$true] %s47
      %s49 = sshll.u32 [#allocation9], 4
      %s50 = int_to_ptr.vmem [resolvable:$true] %s49
      %55 = dma.hbm_to_vmem [thread:$0]  %s48, 6144, %s50, [#allocation8], 384, 384, 24
    $region13: #{tpu_custom_call.1} parent=1 // pred_fallthru
      _
    // Predicated region
    $region14: #{tpu_custom_call.1} parent=1 // pred_check
      _
    $region15: #{tpu_custom_call.1} parent=1 // pred_check_branch
      %57 = sbr.rel (0) target = $region17
    $region16: #{tpu_custom_call.1} parent=1 // pred_region
      %59 = vsyncadd [#allocation11], 0
      %s61 = sshll.u32 %s3, 4
      %s62 = int_to_ptr.hbm [resolvable:$true] %s61
      %s63 = sshll.u32 [#allocation10], 4
      %s64 = int_to_ptr.vmem [resolvable:$true] %s63
      %66 = dma.hbm_to_vmem [thread:$0]  %s62, 48, %s64, [#allocation11]
    $region17: #{tpu_custom_call.1} parent=1 // pred_fallthru
      _
    // Predicated region
    $region18: #{tpu_custom_call.1} parent=1 // pred_check
      _
    $region19: #{tpu_custom_call.1} parent=1 // pred_check_branch
      %68 = sbr.rel (0) target = $region21
    $region20: #{tpu_custom_call.1} parent=1 // pred_region
      _
    $region21: #{tpu_custom_call.1} parent=1 // pred_fallthru
      _
    // Predicated region
    $region22: #{tpu_custom_call.1} parent=1 // pred_check
      _
    $region23: #{tpu_custom_call.1} parent=1 // pred_check_branch
      %70 = sbr.rel (0) target = $region25
    $region24: #{tpu_custom_call.1} parent=1 // pred_region
      %72 = dma.done [#allocation5], 1024
    $region25: #{tpu_custom_call.1} parent=1 // pred_fallthru
      _
    // Predicated region
    $region26: #{tpu_custom_call.1} parent=1 // pred_check
      _
    $region27: #{tpu_custom_call.1} parent=1 // pred_check_branch
      %74 = sbr.rel (0) target = $region29
    $region28: #{tpu_custom_call.1} parent=1 // pred_region
      %76 = dma.done [#allocation8], 768
    $region29: #{tpu_custom_call.1} parent=1 // pred_fallthru
      _
    // Predicated region
    $region30: #{tpu_custom_call.1} parent=1 // pred_check
      _
    $region31: #{tpu_custom_call.1} parent=1 // pred_check_branch
      %78 = sbr.rel (0) target = $region33
    $region32: #{tpu_custom_call.1} parent=1 // pred_region
      %80 = dma.done [#allocation8], 6144
    $region33: #{tpu_custom_call.1} parent=1 // pred_fallthru
      _
    // Predicated region
    $region34: #{tpu_custom_call.1} parent=1 // pred_check
      _
    $region35: #{tpu_custom_call.1} parent=1 // pred_check_branch
      %82 = sbr.rel (0) target = $region37
    $region36: #{tpu_custom_call.1} parent=1 // pred_region
      %84 = dma.done [#allocation11], 48
    $region37: #{tpu_custom_call.1} parent=1 // pred_fallthru
      _
    %p85 = scmp.eq.s32.totalorder 0, 0
    // Predicated region
    $region38: #{tpu_custom_call.1} parent=1 // pred_check
      %p86 = pneg %p85
    $region39: #{tpu_custom_call.1} parent=1 // pred_check_branch
      %88 = sbr.rel (%p86) target = $region41
    $region40: #{tpu_custom_call.1} parent=1 // pred_region
      %89 = vst [vmem:[#allocation2] sm:$0xff] 0.0
    $region41: #{tpu_custom_call.1} parent=1 // pred_fallthru
      _
    %v90 = vld [vmem:[#allocation7] sm:$0xff]
    %v91 = vld [vmem:[#allocation7 + $0x8] sm:$0xff]
    %v92 = vld [vmem:[#allocation7 + $0x10] sm:$0xff]
    %v93 = vld [vmem:[#allocation7 + $0x18] sm:$0xff]
    %v94 = vld [vmem:[#allocation7 + $0x20] sm:$0xff]
    %v95 = vld [vmem:[#allocation7 + $0x28] sm:$0xff]
    %v96 = vld [vmem:[#allocation9] sm:$0xff]
    %v97 = vld [vmem:[#allocation9 + $0x8] sm:$0xff]
    %v98 = vld [vmem:[#allocation9 + $0x10] sm:$0xff]
    %v99 = vld [vmem:[#allocation9 + $0x18] sm:$0xff]
    %v100 = vld [vmem:[#allocation9 + $0x20] sm:$0xff]
    %v101 = vld [vmem:[#allocation9 + $0x28] sm:$0xff]
    %v102 = vld [vmem:[#allocation9 + $0x30] sm:$0xff]
    %v103 = vld [vmem:[#allocation9 + $0x38] sm:$0xff]
    %v104 = vld [vmem:[#allocation9 + $0x40] sm:$0xff]
    %v105 = vld [vmem:[#allocation9 + $0x48] sm:$0xff]
    %v106 = vld [vmem:[#allocation9 + $0x50] sm:$0xff]
    %v107 = vld [vmem:[#allocation9 + $0x58] sm:$0xff]
    %v108 = vld [vmem:[#allocation9 + $0x60] sm:$0xff]
    %v109 = vld [vmem:[#allocation9 + $0x68] sm:$0xff]
    %v110 = vld [vmem:[#allocation9 + $0x70] sm:$0xff]
    %v111 = vld [vmem:[#allocation9 + $0x78] sm:$0xff]
    %v112 = vld [vmem:[#allocation9 + $0x80] sm:$0xff]
    %v113 = vld [vmem:[#allocation9 + $0x88] sm:$0xff]
    %v114 = vld [vmem:[#allocation9 + $0x90] sm:$0xff]
    %v115 = vld [vmem:[#allocation9 + $0x98] sm:$0xff]
    %v116 = vld [vmem:[#allocation9 + $0xa0] sm:$0xff]
    %v117 = vld [vmem:[#allocation9 + $0xa8] sm:$0xff]
    %v118 = vld [vmem:[#allocation9 + $0xb0] sm:$0xff]
    %v119 = vld [vmem:[#allocation9 + $0xb8] sm:$0xff]
    %v120 = vld [vmem:[#allocation9 + $0xc0] sm:$0xff]
    %v121 = vld [vmem:[#allocation9 + $0xc8] sm:$0xff]
    %v122 = vld [vmem:[#allocation9 + $0xd0] sm:$0xff]
    %v123 = vld [vmem:[#allocation9 + $0xd8] sm:$0xff]
    %v124 = vld [vmem:[#allocation9 + $0xe0] sm:$0xff]
    %v125 = vld [vmem:[#allocation9 + $0xe8] sm:$0xff]
    %v126 = vld [vmem:[#allocation9 + $0xf0] sm:$0xff]
    %v127 = vld [vmem:[#allocation9 + $0xf8] sm:$0xff]
    %v128 = vld [vmem:[#allocation9 + $0x100] sm:$0xff]
    %v129 = vld [vmem:[#allocation9 + $0x108] sm:$0xff]
    %v130 = vld [vmem:[#allocation9 + $0x110] sm:$0xff]
    %v131 = vld [vmem:[#allocation9 + $0x118] sm:$0xff]
    %v132 = vld [vmem:[#allocation9 + $0x120] sm:$0xff]
    %v133 = vld [vmem:[#allocation9 + $0x128] sm:$0xff]
    %v134 = vld [vmem:[#allocation9 + $0x130] sm:$0xff]
    %v135 = vld [vmem:[#allocation9 + $0x138] sm:$0xff]
    %v136 = vld [vmem:[#allocation9 + $0x140] sm:$0xff]
    %v137 = vld [vmem:[#allocation9 + $0x148] sm:$0xff]
    %v138 = vld [vmem:[#allocation9 + $0x150] sm:$0xff]
    %v139 = vld [vmem:[#allocation9 + $0x158] sm:$0xff]
    %v140 = vld [vmem:[#allocation9 + $0x160] sm:$0xff]
    %v141 = vld [vmem:[#allocation9 + $0x168] sm:$0xff]
    %v142 = vld [vmem:[#allocation9 + $0x170] sm:$0xff]
    %v143 = vld [vmem:[#allocation9 + $0x178] sm:$0xff]
    %v144 = vld [vmem:[#allocation10] sm:$0x7]
    %v145 = vld [vmem:[%s4] sm:$0x1]
    %v146 = vld [vmem:[#allocation4] sm:$0xff]
    %v147 = vld [vmem:[#allocation4 + $0x8] sm:$0xff]
    %v148 = vld [vmem:[#allocation4 + $0x10] sm:$0xff]
    %v149 = vld [vmem:[#allocation4 + $0x18] sm:$0xff]
    %v150 = vld [vmem:[#allocation4 + $0x20] sm:$0xff]
    %v151 = vld [vmem:[#allocation4 + $0x28] sm:$0xff]
    %v152 = vld [vmem:[#allocation4 + $0x30] sm:$0xff]
    %v153 = vld [vmem:[#allocation4 + $0x38] sm:$0xff]
    %v155 = vperm.slane %v144, 0
    %v156 = vperm.slane %v144, 1
    %v157 = vperm.slane %v144, 2
    %vm161 = vcmask 130048
    %v163 = vsel %vm161, %v146, 0
    %v166 = vsel %vm161, %v147, 0
    %v169 = vsel %vm161, %v148, 0
    %v172 = vsel %vm161, %v149, 0
    %v175 = vsel %vm161, %v150, 0
    %v178 = vsel %vm161, %v151, 0
    %v181 = vsel %vm161, %v152, 0
    %v184 = vsel %vm161, %v153, 0
    %186 = vmatpush.msra.mxu0 0.0
    %187 = vmatpush.msra.mxu0 0.0
    %188 = vmatpush.msra.mxu0 0.0
    %189 = vmatpush.msra.mxu0 0.0
    %190 = vmatpush.msra.mxu0 0.0
    %191 = vmatpush.msra.mxu0 0.0
    %192 = vmatpush.msra.mxu0 0.0
    %193 = vmatpush.msra.mxu0 0.0
    %194 = vmatpush.msra.mxu0 0.0
    %195 = vmatpush.msra.mxu0 0.0
    %196 = vmatpush.msra.mxu0 0.0
    %197 = vmatpush.msra.mxu0 0.0
    %198 = vmatpush.msra.mxu0 0.0
    %199 = vmatpush.msra.mxu0 0.0
    %200 = vmatpush.msra.mxu0 %v93
    %201 = vmatpush.msra.mxu0 %v90
    %202 = vmatmul.f32.gmra.mxu0 %v163
    %v203 = vpop.f32.mrf.mxu0
    %v204 = vadd.f32 %v155, %v203
    %205 = vmatmul.f32.gmra.mxu0 %v166
    %v206 = vpop.f32.mrf.mxu0
    %v207 = vadd.f32 %v155, %v206
    %208 = vmatmul.f32.gmra.mxu0 %v169
    %v209 = vpop.f32.mrf.mxu0
    %v210 = vadd.f32 %v155, %v209
    %211 = vmatmul.f32.gmra.mxu0 %v172
    %v212 = vpop.f32.mrf.mxu0
    %v213 = vadd.f32 %v155, %v212
    %214 = vmatmul.f32.gmra.mxu0 %v175
    %v215 = vpop.f32.mrf.mxu0
    %v216 = vadd.f32 %v155, %v215
    %217 = vmatmul.f32.gmra.mxu0 %v178
    %v218 = vpop.f32.mrf.mxu0
    %v219 = vadd.f32 %v155, %v218
    %220 = vmatmul.f32.gmra.mxu0 %v181
    %v221 = vpop.f32.mrf.mxu0
    %v222 = vadd.f32 %v155, %v221
    %223 = vmatmul.f32.gmra.mxu0 %v184
    %v224 = vpop.f32.mrf.mxu0
    %v225 = vadd.f32 %v155, %v224
    %226 = vdwg.mxu0
    %227 = vmatpush.msra.mxu0 0.0
    %228 = vmatpush.msra.mxu0 0.0
    %229 = vmatpush.msra.mxu0 0.0
    %230 = vmatpush.msra.mxu0 0.0
    %231 = vmatpush.msra.mxu0 0.0
    %232 = vmatpush.msra.mxu0 0.0
    %233 = vmatpush.msra.mxu0 0.0
    %234 = vmatpush.msra.mxu0 0.0
    %235 = vmatpush.msra.mxu0 0.0
    %236 = vmatpush.msra.mxu0 0.0
    %237 = vmatpush.msra.mxu0 0.0
    %238 = vmatpush.msra.mxu0 0.0
    %239 = vmatpush.msra.mxu0 0.0
    %240 = vmatpush.msra.mxu0 0.0
    %241 = vmatpush.msra.mxu0 %v94
    %242 = vmatpush.msra.mxu0 %v91
    %243 = vmatmul.f32.gmra.mxu0 %v163
    %v244 = vpop.f32.mrf.mxu0
    %v245 = vadd.f32 %v156, %v244
    %246 = vmatmul.f32.gmra.mxu0 %v166
    %v247 = vpop.f32.mrf.mxu0
    %v248 = vadd.f32 %v156, %v247
    %249 = vmatmul.f32.gmra.mxu0 %v169
    %v250 = vpop.f32.mrf.mxu0
    %v251 = vadd.f32 %v156, %v250
    %252 = vmatmul.f32.gmra.mxu0 %v172
    %v253 = vpop.f32.mrf.mxu0
    %v254 = vadd.f32 %v156, %v253
    %255 = vmatmul.f32.gmra.mxu0 %v175
    %v256 = vpop.f32.mrf.mxu0
    %v257 = vadd.f32 %v156, %v256
    %258 = vmatmul.f32.gmra.mxu0 %v178
    %v259 = vpop.f32.mrf.mxu0
    %v260 = vadd.f32 %v156, %v259
    %261 = vmatmul.f32.gmra.mxu0 %v181
    %v262 = vpop.f32.mrf.mxu0
    %v263 = vadd.f32 %v156, %v262
    %264 = vmatmul.f32.gmra.mxu0 %v184
    %v265 = vpop.f32.mrf.mxu0
    %v266 = vadd.f32 %v156, %v265
    %267 = vdwg.mxu0
    %268 = vmatpush.msra.mxu0 0.0
    %269 = vmatpush.msra.mxu0 0.0
    %270 = vmatpush.msra.mxu0 0.0
    %271 = vmatpush.msra.mxu0 0.0
    %272 = vmatpush.msra.mxu0 0.0
    %273 = vmatpush.msra.mxu0 0.0
    %274 = vmatpush.msra.mxu0 0.0
    %275 = vmatpush.msra.mxu0 0.0
    %276 = vmatpush.msra.mxu0 0.0
    %277 = vmatpush.msra.mxu0 0.0
    %278 = vmatpush.msra.mxu0 0.0
    %279 = vmatpush.msra.mxu0 0.0
    %280 = vmatpush.msra.mxu0 0.0
    %281 = vmatpush.msra.mxu0 0.0
    %282 = vmatpush.msra.mxu0 %v95
    %283 = vmatpush.msra.mxu0 %v92
    %284 = vmatmul.f32.gmra.mxu0 %v163
    %v285 = vpop.f32.mrf.mxu0
    %v286 = vadd.f32 %v157, %v285
    %287 = vmatmul.f32.gmra.mxu0 %v166
    %v288 = vpop.f32.mrf.mxu0
    %v289 = vadd.f32 %v157, %v288
    %290 = vmatmul.f32.gmra.mxu0 %v169
    %v291 = vpop.f32.mrf.mxu0
    %v292 = vadd.f32 %v157, %v291
    %293 = vmatmul.f32.gmra.mxu0 %v172
    %v294 = vpop.f32.mrf.mxu0
    %v295 = vadd.f32 %v157, %v294
    %296 = vmatmul.f32.gmra.mxu0 %v175
    %v297 = vpop.f32.mrf.mxu0
    %v298 = vadd.f32 %v157, %v297
    %299 = vmatmul.f32.gmra.mxu0 %v178
    %v300 = vpop.f32.mrf.mxu0
    %v301 = vadd.f32 %v157, %v300
    %302 = vmatmul.f32.gmra.mxu0 %v181
    %v303 = vpop.f32.mrf.mxu0
    %v304 = vadd.f32 %v157, %v303
    %305 = vmatmul.f32.gmra.mxu0 %v184
    %v306 = vpop.f32.mrf.mxu0
    %v307 = vadd.f32 %v157, %v306
    %308 = vdwg.mxu0
    %309 = vst [vmem:[#allocation3] sm:$0xff] %v204
    %310 = vst [vmem:[#allocation3 + $0x8] sm:$0xff] %v245
    %311 = vst [vmem:[#allocation3 + $0x10] sm:$0xff] %v286
    %312 = vst [vmem:[#allocation3 + $0x18] sm:$0xff] %v207
    %313 = vst [vmem:[#allocation3 + $0x20] sm:$0xff] %v248
    %314 = vst [vmem:[#allocation3 + $0x28] sm:$0xff] %v289
    %315 = vst [vmem:[#allocation3 + $0x30] sm:$0xff] %v210
    %316 = vst [vmem:[#allocation3 + $0x38] sm:$0xff] %v251
    %317 = vst [vmem:[#allocation3 + $0x40] sm:$0xff] %v292
    %318 = vst [vmem:[#allocation3 + $0x48] sm:$0xff] %v213
    %319 = vst [vmem:[#allocation3 + $0x50] sm:$0xff] %v254
    %320 = vst [vmem:[#allocation3 + $0x58] sm:$0xff] %v295
    %321 = vst [vmem:[#allocation3 + $0x60] sm:$0xff] %v216
    %322 = vst [vmem:[#allocation3 + $0x68] sm:$0xff] %v257
    %323 = vst [vmem:[#allocation3 + $0x70] sm:$0xff] %v298
    %324 = vst [vmem:[#allocation3 + $0x78] sm:$0xff] %v219
    %325 = vst [vmem:[#allocation3 + $0x80] sm:$0xff] %v260
    %326 = vst [vmem:[#allocation3 + $0x88] sm:$0xff] %v301
    %327 = vst [vmem:[#allocation3 + $0x90] sm:$0xff] %v222
    %328 = vst [vmem:[#allocation3 + $0x98] sm:$0xff] %v263
    %329 = vst [vmem:[#allocation3 + $0xa0] sm:$0xff] %v304
    %330 = vst [vmem:[#allocation3 + $0xa8] sm:$0xff] %v225
    %331 = vst [vmem:[#allocation3 + $0xb0] sm:$0xff] %v266
    %332 = vst [vmem:[#allocation3 + $0xb8] sm:$0xff] %v307
    %v333 = vld [vmem:[#allocation2] sm:$0xff]
    %v334 = vld [vmem:[#allocation3] sm:$0xff]
    %v335 = vld [vmem:[#allocation3 + $0x8] sm:$0xff]
    %v336 = vld [vmem:[#allocation3 + $0x10] sm:$0xff]
    %337 = vmatpush.msra.mxu0 %v141
    %338 = vmatpush.msra.mxu0 %v138
    %339 = vmatpush.msra.mxu0 %v135
    %340 = vmatpush.msra.mxu0 %v132
    %341 = vmatpush.msra.mxu0 %v129
    %342 = vmatpush.msra.mxu0 %v126
    %343 = vmatpush.msra.mxu0 %v123
    %344 = vmatpush.msra.mxu0 %v120
    %345 = vmatpush.msra.mxu0 %v117
    %346 = vmatpush.msra.mxu0 %v114
    %347 = vmatpush.msra.mxu0 %v111
    %348 = vmatpush.msra.mxu0 %v108
    %349 = vmatpush.msra.mxu0 %v105
    %350 = vmatpush.msra.mxu0 %v102
    %351 = vmatpush.msra.mxu0 %v99
    %352 = vmatpush.msra.mxu0 %v96
    %353 = vmatmul.f32.gmra.mxu0 %v333
    %v354 = vpop.f32.mrf.mxu0
    %v355 = vadd.f32 0.0, %v354
    %356 = vdwg.mxu0
    %357 = vmatpush.msra.mxu0 %v142
    %358 = vmatpush.msra.mxu0 %v139
    %359 = vmatpush.msra.mxu0 %v136
    %360 = vmatpush.msra.mxu0 %v133
    %361 = vmatpush.msra.mxu0 %v130
    %362 = vmatpush.msra.mxu0 %v127
    %363 = vmatpush.msra.mxu0 %v124
    %364 = vmatpush.msra.mxu0 %v121
    %365 = vmatpush.msra.mxu0 %v118
    %366 = vmatpush.msra.mxu0 %v115
    %367 = vmatpush.msra.mxu0 %v112
    %368 = vmatpush.msra.mxu0 %v109
    %369 = vmatpush.msra.mxu0 %v106
    %370 = vmatpush.msra.mxu0 %v103
    %371 = vmatpush.msra.mxu0 %v100
    %372 = vmatpush.msra.mxu0 %v97
    %373 = vmatmul.f32.gmra.mxu0 %v333
    %v374 = vpop.f32.mrf.mxu0
    %v375 = vadd.f32 0.0, %v374
    %376 = vdwg.mxu0
    %377 = vmatpush.msra.mxu0 %v143
    %378 = vmatpush.msra.mxu0 %v140
    %379 = vmatpush.msra.mxu0 %v137
    %380 = vmatpush.msra.mxu0 %v134
    %381 = vmatpush.msra.mxu0 %v131
    %382 = vmatpush.msra.mxu0 %v128
    %383 = vmatpush.msra.mxu0 %v125
    %384 = vmatpush.msra.mxu0 %v122
    %385 = vmatpush.msra.mxu0 %v119
    %386 = vmatpush.msra.mxu0 %v116
    %387 = vmatpush.msra.mxu0 %v113
    %388 = vmatpush.msra.mxu0 %v110
    %389 = vmatpush.msra.mxu0 %v107
    %390 = vmatpush.msra.mxu0 %v104
    %391 = vmatpush.msra.mxu0 %v101
    %392 = vmatpush.msra.mxu0 %v98
    %393 = vmatmul.f32.gmra.mxu0 %v333
    %v394 = vpop.f32.mrf.mxu0
    %v395 = vadd.f32 0.0, %v394
    %396 = vdwg.mxu0
    %v397 = vadd.f32 %v334, %v355
    %v398 = vadd.f32 %v335, %v375
    %v399 = vxor.u32 %v397, 2147483648
    %v400 = vxor.u32 %v398, 2147483648
    %v401 = vmul.f32 %v399, 1.442695
    %v402 = vpow.pop %v401
    %v403 = vmul.f32 %v400, 1.442695
    %v404 = vpow.pop %v403
    %v405 = vadd.f32 %v402, 1.0
    %v406 = vadd.f32 %v404, 1.0
    %v407 = vrcp.pop %v405
    %v408 = vmul.f32 %v405, %v407
    %v409 = vsub.f32 1.0, %v408
    %v410 = vmul.f32 %v407, %v409
    %v411 = vadd.f32 %v407, %v410
    %vm412 = vweird.f32 %v405
    %vm413 = vweird.f32 %v407
    %vm414 = vmor %vm412, %vm413
    %v415 = vsel %vm414, %v407, %v411
    %v416 = vand.u32 2147483647, %v405
    %vm417 = vcmp.eq.f32.partialorder %v416, 8.507059e+37
    %v418 = vand.u32 %v405, 2147483648
    %v419 = vor.u32 1.1754944e-38, %v418
    %v420 = vsel %vm417, %v419, %v415
    %v421 = vmul.f32 1.0, %v420
    %v422 = vrcp.pop %v406
    %v423 = vmul.f32 %v406, %v422
    %v424 = vsub.f32 1.0, %v423
    %v425 = vmul.f32 %v422, %v424
    %v426 = vadd.f32 %v422, %v425
    %vm427 = vweird.f32 %v406
    %vm428 = vweird.f32 %v422
    %vm429 = vmor %vm427, %vm428
    %v430 = vsel %vm429, %v422, %v426
    %v431 = vand.u32 2147483647, %v406
    %vm432 = vcmp.eq.f32.partialorder %v431, 8.507059e+37
    %v433 = vand.u32 %v406, 2147483648
    %v434 = vor.u32 1.1754944e-38, %v433
    %v435 = vsel %vm432, %v434, %v430
    %v436 = vmul.f32 1.0, %v435
    %v438 = vperm.slane %v145, 0
    %v440 = vadd.f32 %v395, %v438
    %v441 = vmul.f32 %v421, %v440
    %v442 = vadd.f32 %v336, %v441
    %v443 = vtanh.pop %v442
    %v444 = vsub.f32 %v333, %v443
    %v445 = vmul.f32 %v436, %v444
    %v446 = vadd.f32 %v443, %v445
    %447 = vst [vmem:[#allocation12] sm:$0xff] %v446
    %s448 = scalar_lea.vmem [#allocation3], 24
    %v449 = vld [vmem:[%s448] sm:$0xff]
    %v450 = vld [vmem:[%s448 + $0x8] sm:$0xff]
    %v451 = vld [vmem:[%s448 + $0x10] sm:$0xff]
    %452 = vmatpush.msra.mxu0 %v141
    %453 = vmatpush.msra.mxu0 %v138
    %454 = vmatpush.msra.mxu0 %v135
    %455 = vmatpush.msra.mxu0 %v132
    %456 = vmatpush.msra.mxu0 %v129
    %457 = vmatpush.msra.mxu0 %v126
    %458 = vmatpush.msra.mxu0 %v123
    %459 = vmatpush.msra.mxu0 %v120
    %460 = vmatpush.msra.mxu0 %v117
    %461 = vmatpush.msra.mxu0 %v114
    %462 = vmatpush.msra.mxu0 %v111
    %463 = vmatpush.msra.mxu0 %v108
    %464 = vmatpush.msra.mxu0 %v105
    %465 = vmatpush.msra.mxu0 %v102
    %466 = vmatpush.msra.mxu0 %v99
    %467 = vmatpush.msra.mxu0 %v96
    %468 = vmatmul.f32.gmra.mxu0 %v446
    %v469 = vpop.f32.mrf.mxu0
    %v470 = vadd.f32 0.0, %v469
    %471 = vdwg.mxu0
    %472 = vmatpush.msra.mxu0 %v142
    %473 = vmatpush.msra.mxu0 %v139
    %474 = vmatpush.msra.mxu0 %v136
    %475 = vmatpush.msra.mxu0 %v133
    %476 = vmatpush.msra.mxu0 %v130
    %477 = vmatpush.msra.mxu0 %v127
    %478 = vmatpush.msra.mxu0 %v124
    %479 = vmatpush.msra.mxu0 %v121
    %480 = vmatpush.msra.mxu0 %v118
    %481 = vmatpush.msra.mxu0 %v115
    %482 = vmatpush.msra.mxu0 %v112
    %483 = vmatpush.msra.mxu0 %v109
    %484 = vmatpush.msra.mxu0 %v106
    %485 = vmatpush.msra.mxu0 %v103
    %486 = vmatpush.msra.mxu0 %v100
    %487 = vmatpush.msra.mxu0 %v97
    %488 = vmatmul.f32.gmra.mxu0 %v446
    %v489 = vpop.f32.mrf.mxu0
    %v490 = vadd.f32 0.0, %v489
    %491 = vdwg.mxu0
    %492 = vmatpush.msra.mxu0 %v143
    %493 = vmatpush.msra.mxu0 %v140
    %494 = vmatpush.msra.mxu0 %v137
    %495 = vmatpush.msra.mxu0 %v134
    %496 = vmatpush.msra.mxu0 %v131
    %497 = vmatpush.msra.mxu0 %v128
    %498 = vmatpush.msra.mxu0 %v125
    %499 = vmatpush.msra.mxu0 %v122
    %500 = vmatpush.msra.mxu0 %v119
    %501 = vmatpush.msra.mxu0 %v116
    %502 = vmatpush.msra.mxu0 %v113
    %503 = vmatpush.msra.mxu0 %v110
    %504 = vmatpush.msra.mxu0 %v107
    %505 = vmatpush.msra.mxu0 %v104
    %506 = vmatpush.msra.mxu0 %v101
    %507 = vmatpush.msra.mxu0 %v98
    %508 = vmatmul.f32.gmra.mxu0 %v446
    %v509 = vpop.f32.mrf.mxu0
    %v510 = vadd.f32 0.0, %v509
    %511 = vdwg.mxu0
    %v512 = vadd.f32 %v449, %v470
    %v513 = vadd.f32 %v450, %v490
    %v514 = vxor.u32 %v512, 2147483648
    %v515 = vxor.u32 %v513, 2147483648
    %v516 = vmul.f32 %v514, 1.442695
    %v517 = vpow.pop %v516
    %v518 = vmul.f32 %v515, 1.442695
    %v519 = vpow.pop %v518
    %v520 = vadd.f32 %v517, 1.0
    %v521 = vadd.f32 %v519, 1.0
    %v522 = vrcp.pop %v520
    %v523 = vmul.f32 %v520, %v522
    %v524 = vsub.f32 1.0, %v523
    %v525 = vmul.f32 %v522, %v524
    %v526 = vadd.f32 %v522, %v525
    %vm527 = vweird.f32 %v520
    %vm528 = vweird.f32 %v522
    %vm529 = vmor %vm527, %vm528
    %v530 = vsel %vm529, %v522, %v526
    %v531 = vand.u32 2147483647, %v520
    %vm532 = vcmp.eq.f32.partialorder %v531, 8.507059e+37
    %v533 = vand.u32 %v520, 2147483648
    %v534 = vor.u32 1.1754944e-38, %v533
    %v535 = vsel %vm532, %v534, %v530
    %v536 = vmul.f32 1.0, %v535
    %v537 = vrcp.pop %v521
    %v538 = vmul.f32 %v521, %v537
    %v539 = vsub.f32 1.0, %v538
    %v540 = vmul.f32 %v537, %v539
    %v541 = vadd.f32 %v537, %v540
    %vm542 = vweird.f32 %v521
    %vm543 = vweird.f32 %v537
    %vm544 = vmor %vm542, %vm543
    %v545 = vsel %vm544, %v537, %v541
    %v546 = vand.u32 2147483647, %v521
    %vm547 = vcmp.eq.f32.partialorder %v546, 8.507059e+37
    %v548 = vand.u32 %v521, 2147483648
    %v549 = vor.u32 1.1754944e-38, %v548
    %v550 = vsel %vm547, %v549, %v545
    %v551 = vmul.f32 1.0, %v550
    %v552 = vadd.f32 %v510, %v438
    %v553 = vmul.f32 %v536, %v552
    %v554 = vadd.f32 %v451, %v553
    %v555 = vtanh.pop %v554
    %v556 = vsub.f32 %v446, %v555
    %v557 = vmul.f32 %v551, %v556
    %v558 = vadd.f32 %v555, %v557
    %s559 = scalar_lea.vmem [#allocation12], 8
    %560 = vst [vmem:[%s559] sm:$0xff] %v558
    %s561 = scalar_lea.vmem [#allocation3], 48
    %v562 = vld [vmem:[%s561] sm:$0xff]
    %v563 = vld [vmem:[%s561 + $0x8] sm:$0xff]
    %v564 = vld [vmem:[%s561 + $0x10] sm:$0xff]
    %565 = vmatpush.msra.mxu0 %v141
    %566 = vmatpush.msra.mxu0 %v138
    %567 = vmatpush.msra.mxu0 %v135
    %568 = vmatpush.msra.mxu0 %v132
    %569 = vmatpush.msra.mxu0 %v129
    %570 = vmatpush.msra.mxu0 %v126
    %571 = vmatpush.msra.mxu0 %v123
    %572 = vmatpush.msra.mxu0 %v120
    %573 = vmatpush.msra.mxu0 %v117
    %574 = vmatpush.msra.mxu0 %v114
    %575 = vmatpush.msra.mxu0 %v111
    %576 = vmatpush.msra.mxu0 %v108
    %577 = vmatpush.msra.mxu0 %v105
    %578 = vmatpush.msra.mxu0 %v102
    %579 = vmatpush.msra.mxu0 %v99
    %580 = vmatpush.msra.mxu0 %v96
    %581 = vmatmul.f32.gmra.mxu0 %v558
    %v582 = vpop.f32.mrf.mxu0
    %v583 = vadd.f32 0.0, %v582
    %584 = vdwg.mxu0
    %585 = vmatpush.msra.mxu0 %v142
    %586 = vmatpush.msra.mxu0 %v139
    %587 = vmatpush.msra.mxu0 %v136
    %588 = vmatpush.msra.mxu0 %v133
    %589 = vmatpush.msra.mxu0 %v130
    %590 = vmatpush.msra.mxu0 %v127
    %591 = vmatpush.msra.mxu0 %v124
    %592 = vmatpush.msra.mxu0 %v121
    %593 = vmatpush.msra.mxu0 %v118
    %594 = vmatpush.msra.mxu0 %v115
    %595 = vmatpush.msra.mxu0 %v112
    %596 = vmatpush.msra.mxu0 %v109
    %597 = vmatpush.msra.mxu0 %v106
    %598 = vmatpush.msra.mxu0 %v103
    %599 = vmatpush.msra.mxu0 %v100
    %600 = vmatpush.msra.mxu0 %v97
    %601 = vmatmul.f32.gmra.mxu0 %v558
    %v602 = vpop.f32.mrf.mxu0
    %v603 = vadd.f32 0.0, %v602
    %604 = vdwg.mxu0
    %605 = vmatpush.msra.mxu0 %v143
    %606 = vmatpush.msra.mxu0 %v140
    %607 = vmatpush.msra.mxu0 %v137
    %608 = vmatpush.msra.mxu0 %v134
    %609 = vmatpush.msra.mxu0 %v131
    %610 = vmatpush.msra.mxu0 %v128
    %611 = vmatpush.msra.mxu0 %v125
    %612 = vmatpush.msra.mxu0 %v122
    %613 = vmatpush.msra.mxu0 %v119
    %614 = vmatpush.msra.mxu0 %v116
    %615 = vmatpush.msra.mxu0 %v113
    %616 = vmatpush.msra.mxu0 %v110
    %617 = vmatpush.msra.mxu0 %v107
    %618 = vmatpush.msra.mxu0 %v104
    %619 = vmatpush.msra.mxu0 %v101
    %620 = vmatpush.msra.mxu0 %v98
    %621 = vmatmul.f32.gmra.mxu0 %v558
    %v622 = vpop.f32.mrf.mxu0
    %v623 = vadd.f32 0.0, %v622
    %624 = vdwg.mxu0
    %v625 = vadd.f32 %v562, %v583
    %v626 = vadd.f32 %v563, %v603
    %v627 = vxor.u32 %v625, 2147483648
    %v628 = vxor.u32 %v626, 2147483648
    %v629 = vmul.f32 %v627, 1.442695
    %v630 = vpow.pop %v629
    %v631 = vmul.f32 %v628, 1.442695
    %v632 = vpow.pop %v631
    %v633 = vadd.f32 %v630, 1.0
    %v634 = vadd.f32 %v632, 1.0
    %v635 = vrcp.pop %v633
    %v636 = vmul.f32 %v633, %v635
    %v637 = vsub.f32 1.0, %v636
    %v638 = vmul.f32 %v635, %v637
    %v639 = vadd.f32 %v635, %v638
    %vm640 = vweird.f32 %v633
    %vm641 = vweird.f32 %v635
    %vm642 = vmor %vm640, %vm641
    %v643 = vsel %vm642, %v635, %v639
    %v644 = vand.u32 2147483647, %v633
    %vm645 = vcmp.eq.f32.partialorder %v644, 8.507059e+37
    %v646 = vand.u32 %v633, 2147483648
    %v647 = vor.u32 1.1754944e-38, %v646
    %v648 = vsel %vm645, %v647, %v643
    %v649 = vmul.f32 1.0, %v648
    %v650 = vrcp.pop %v634
    %v651 = vmul.f32 %v634, %v650
    %v652 = vsub.f32 1.0, %v651
    %v653 = vmul.f32 %v650, %v652
    %v654 = vadd.f32 %v650, %v653
    %vm655 = vweird.f32 %v634
    %vm656 = vweird.f32 %v650
    %vm657 = vmor %vm655, %vm656
    %v658 = vsel %vm657, %v650, %v654
    %v659 = vand.u32 2147483647, %v634
    %vm660 = vcmp.eq.f32.partialorder %v659, 8.507059e+37
    %v661 = vand.u32 %v634, 2147483648
    %v662 = vor.u32 1.1754944e-38, %v661
    %v663 = vsel %vm660, %v662, %v658
    %v664 = vmul.f32 1.0, %v663
    %v665 = vadd.f32 %v623, %v438
    %v666 = vmul.f32 %v649, %v665
    %v667 = vadd.f32 %v564, %v666
    %v668 = vtanh.pop %v667
    %v669 = vsub.f32 %v558, %v668
    %v670 = vmul.f32 %v664, %v669
    %v671 = vadd.f32 %v668, %v670
    %s672 = scalar_lea.vmem [#allocation12], 16
    %673 = vst [vmem:[%s672] sm:$0xff] %v671
    %s674 = scalar_lea.vmem [#allocation3], 72
    %v675 = vld [vmem:[%s674] sm:$0xff]
    %v676 = vld [vmem:[%s674 + $0x8] sm:$0xff]
    %v677 = vld [vmem:[%s674 + $0x10] sm:$0xff]
    %678 = vmatpush.msra.mxu0 %v141
    %679 = vmatpush.msra.mxu0 %v138
    %680 = vmatpush.msra.mxu0 %v135
    %681 = vmatpush.msra.mxu0 %v132
    %682 = vmatpush.msra.mxu0 %v129
    %683 = vmatpush.msra.mxu0 %v126
    %684 = vmatpush.msra.mxu0 %v123
    %685 = vmatpush.msra.mxu0 %v120
    %686 = vmatpush.msra.mxu0 %v117
    %687 = vmatpush.msra.mxu0 %v114
    %688 = vmatpush.msra.mxu0 %v111
    %689 = vmatpush.msra.mxu0 %v108
    %690 = vmatpush.msra.mxu0 %v105
    %691 = vmatpush.msra.mxu0 %v102
    %692 = vmatpush.msra.mxu0 %v99
    %693 = vmatpush.msra.mxu0 %v96
    %694 = vmatmul.f32.gmra.mxu0 %v671
    %v695 = vpop.f32.mrf.mxu0
    %v696 = vadd.f32 0.0, %v695
    %697 = vdwg.mxu0
    %698 = vmatpush.msra.mxu0 %v142
    %699 = vmatpush.msra.mxu0 %v139
    %700 = vmatpush.msra.mxu0 %v136
    %701 = vmatpush.msra.mxu0 %v133
    %702 = vmatpush.msra.mxu0 %v130
    %703 = vmatpush.msra.mxu0 %v127
    %704 = vmatpush.msra.mxu0 %v124
    %705 = vmatpush.msra.mxu0 %v121
    %706 = vmatpush.msra.mxu0 %v118
    %707 = vmatpush.msra.mxu0 %v115
    %708 = vmatpush.msra.mxu0 %v112
    %709 = vmatpush.msra.mxu0 %v109
    %710 = vmatpush.msra.mxu0 %v106
    %711 = vmatpush.msra.mxu0 %v103
    %712 = vmatpush.msra.mxu0 %v100
    %713 = vmatpush.msra.mxu0 %v97
    %714 = vmatmul.f32.gmra.mxu0 %v671
    %v715 = vpop.f32.mrf.mxu0
    %v716 = vadd.f32 0.0, %v715
    %717 = vdwg.mxu0
    %718 = vmatpush.msra.mxu0 %v143
    %719 = vmatpush.msra.mxu0 %v140
    %720 = vmatpush.msra.mxu0 %v137
    %721 = vmatpush.msra.mxu0 %v134
    %722 = vmatpush.msra.mxu0 %v131
    %723 = vmatpush.msra.mxu0 %v128
    %724 = vmatpush.msra.mxu0 %v125
    %725 = vmatpush.msra.mxu0 %v122
    %726 = vmatpush.msra.mxu0 %v119
    %727 = vmatpush.msra.mxu0 %v116
    %728 = vmatpush.msra.mxu0 %v113
    %729 = vmatpush.msra.mxu0 %v110
    %730 = vmatpush.msra.mxu0 %v107
    %731 = vmatpush.msra.mxu0 %v104
    %732 = vmatpush.msra.mxu0 %v101
    %733 = vmatpush.msra.mxu0 %v98
    %734 = vmatmul.f32.gmra.mxu0 %v671
    %v735 = vpop.f32.mrf.mxu0
    %v736 = vadd.f32 0.0, %v735
    %737 = vdwg.mxu0
    %v738 = vadd.f32 %v675, %v696
    %v739 = vadd.f32 %v676, %v716
    %v740 = vxor.u32 %v738, 2147483648
    %v741 = vxor.u32 %v739, 2147483648
    %v742 = vmul.f32 %v740, 1.442695
    %v743 = vpow.pop %v742
    %v744 = vmul.f32 %v741, 1.442695
    %v745 = vpow.pop %v744
    %v746 = vadd.f32 %v743, 1.0
    %v747 = vadd.f32 %v745, 1.0
    %v748 = vrcp.pop %v746
    %v749 = vmul.f32 %v746, %v748
    %v750 = vsub.f32 1.0, %v749
    %v751 = vmul.f32 %v748, %v750
    %v752 = vadd.f32 %v748, %v751
    %vm753 = vweird.f32 %v746
    %vm754 = vweird.f32 %v748
    %vm755 = vmor %vm753, %vm754
    %v756 = vsel %vm755, %v748, %v752
    %v757 = vand.u32 2147483647, %v746
    %vm758 = vcmp.eq.f32.partialorder %v757, 8.507059e+37
    %v759 = vand.u32 %v746, 2147483648
    %v760 = vor.u32 1.1754944e-38, %v759
    %v761 = vsel %vm758, %v760, %v756
    %v762 = vmul.f32 1.0, %v761
    %v763 = vrcp.pop %v747
    %v764 = vmul.f32 %v747, %v763
    %v765 = vsub.f32 1.0, %v764
    %v766 = vmul.f32 %v763, %v765
    %v767 = vadd.f32 %v763, %v766
    %vm768 = vweird.f32 %v747
    %vm769 = vweird.f32 %v763
    %vm770 = vmor %vm768, %vm769
    %v771 = vsel %vm770, %v763, %v767
    %v772 = vand.u32 2147483647, %v747
    %vm773 = vcmp.eq.f32.partialorder %v772, 8.507059e+37
    %v774 = vand.u32 %v747, 2147483648
    %v775 = vor.u32 1.1754944e-38, %v774
    %v776 = vsel %vm773, %v775, %v771
    %v777 = vmul.f32 1.0, %v776
    %v778 = vadd.f32 %v736, %v438
    %v779 = vmul.f32 %v762, %v778
    %v780 = vadd.f32 %v677, %v779
    %v781 = vtanh.pop %v780
    %v782 = vsub.f32 %v671, %v781
    %v783 = vmul.f32 %v777, %v782
    %v784 = vadd.f32 %v781, %v783
    %s785 = scalar_lea.vmem [#allocation12], 24
    %786 = vst [vmem:[%s785] sm:$0xff] %v784
    %s787 = scalar_lea.vmem [#allocation3], 96
    %v788 = vld [vmem:[%s787] sm:$0xff]
    %v789 = vld [vmem:[%s787 + $0x8] sm:$0xff]
    %v790 = vld [vmem:[%s787 + $0x10] sm:$0xff]
    %791 = vmatpush.msra.mxu0 %v141
    %792 = vmatpush.msra.mxu0 %v138
    %793 = vmatpush.msra.mxu0 %v135
    %794 = vmatpush.msra.mxu0 %v132
    %795 = vmatpush.msra.mxu0 %v129
    %796 = vmatpush.msra.mxu0 %v126
    %797 = vmatpush.msra.mxu0 %v123
    %798 = vmatpush.msra.mxu0 %v120
    %799 = vmatpush.msra.mxu0 %v117
    %800 = vmatpush.msra.mxu0 %v114
    %801 = vmatpush.msra.mxu0 %v111
    %802 = vmatpush.msra.mxu0 %v108
    %803 = vmatpush.msra.mxu0 %v105
    %804 = vmatpush.msra.mxu0 %v102
    %805 = vmatpush.msra.mxu0 %v99
    %806 = vmatpush.msra.mxu0 %v96
    %807 = vmatmul.f32.gmra.mxu0 %v784
    %v808 = vpop.f32.mrf.mxu0
    %v809 = vadd.f32 0.0, %v808
    %810 = vdwg.mxu0
    %811 = vmatpush.msra.mxu0 %v142
    %812 = vmatpush.msra.mxu0 %v139
    %813 = vmatpush.msra.mxu0 %v136
    %814 = vmatpush.msra.mxu0 %v133
    %815 = vmatpush.msra.mxu0 %v130
    %816 = vmatpush.msra.mxu0 %v127
    %817 = vmatpush.msra.mxu0 %v124
    %818 = vmatpush.msra.mxu0 %v121
    %819 = vmatpush.msra.mxu0 %v118
    %820 = vmatpush.msra.mxu0 %v115
    %821 = vmatpush.msra.mxu0 %v112
    %822 = vmatpush.msra.mxu0 %v109
    %823 = vmatpush.msra.mxu0 %v106
    %824 = vmatpush.msra.mxu0 %v103
    %825 = vmatpush.msra.mxu0 %v100
    %826 = vmatpush.msra.mxu0 %v97
    %827 = vmatmul.f32.gmra.mxu0 %v784
    %v828 = vpop.f32.mrf.mxu0
    %v829 = vadd.f32 0.0, %v828
    %830 = vdwg.mxu0
    %831 = vmatpush.msra.mxu0 %v143
    %832 = vmatpush.msra.mxu0 %v140
    %833 = vmatpush.msra.mxu0 %v137
    %834 = vmatpush.msra.mxu0 %v134
    %835 = vmatpush.msra.mxu0 %v131
    %836 = vmatpush.msra.mxu0 %v128
    %837 = vmatpush.msra.mxu0 %v125
    %838 = vmatpush.msra.mxu0 %v122
    %839 = vmatpush.msra.mxu0 %v119
    %840 = vmatpush.msra.mxu0 %v116
    %841 = vmatpush.msra.mxu0 %v113
    %842 = vmatpush.msra.mxu0 %v110
    %843 = vmatpush.msra.mxu0 %v107
    %844 = vmatpush.msra.mxu0 %v104
    %845 = vmatpush.msra.mxu0 %v101
    %846 = vmatpush.msra.mxu0 %v98
    %847 = vmatmul.f32.gmra.mxu0 %v784
    %v848 = vpop.f32.mrf.mxu0
    %v849 = vadd.f32 0.0, %v848
    %850 = vdwg.mxu0
    %v851 = vadd.f32 %v788, %v809
    %v852 = vadd.f32 %v789, %v829
    %v853 = vxor.u32 %v851, 2147483648
    %v854 = vxor.u32 %v852, 2147483648
    %v855 = vmul.f32 %v853, 1.442695
    %v856 = vpow.pop %v855
    %v857 = vmul.f32 %v854, 1.442695
    %v858 = vpow.pop %v857
    %v859 = vadd.f32 %v856, 1.0
    %v860 = vadd.f32 %v858, 1.0
    %v861 = vrcp.pop %v859
    %v862 = vmul.f32 %v859, %v861
    %v863 = vsub.f32 1.0, %v862
    %v864 = vmul.f32 %v861, %v863
    %v865 = vadd.f32 %v861, %v864
    %vm866 = vweird.f32 %v859
    %vm867 = vweird.f32 %v861
    %vm868 = vmor %vm866, %vm867
    %v869 = vsel %vm868, %v861, %v865
    %v870 = vand.u32 2147483647, %v859
    %vm871 = vcmp.eq.f32.partialorder %v870, 8.507059e+37
    %v872 = vand.u32 %v859, 2147483648
    %v873 = vor.u32 1.1754944e-38, %v872
    %v874 = vsel %vm871, %v873, %v869
    %v875 = vmul.f32 1.0, %v874
    %v876 = vrcp.pop %v860
    %v877 = vmul.f32 %v860, %v876
    %v878 = vsub.f32 1.0, %v877
    %v879 = vmul.f32 %v876, %v878
    %v880 = vadd.f32 %v876, %v879
    %vm881 = vweird.f32 %v860
    %vm882 = vweird.f32 %v876
    %vm883 = vmor %vm881, %vm882
    %v884 = vsel %vm883, %v876, %v880
    %v885 = vand.u32 2147483647, %v860
    %vm886 = vcmp.eq.f32.partialorder %v885, 8.507059e+37
    %v887 = vand.u32 %v860, 2147483648
    %v888 = vor.u32 1.1754944e-38, %v887
    %v889 = vsel %vm886, %v888, %v884
    %v890 = vmul.f32 1.0, %v889
    %v891 = vadd.f32 %v849, %v438
    %v892 = vmul.f32 %v875, %v891
    %v893 = vadd.f32 %v790, %v892
    %v894 = vtanh.pop %v893
    %v895 = vsub.f32 %v784, %v894
    %v896 = vmul.f32 %v890, %v895
    %v897 = vadd.f32 %v894, %v896
    %s898 = scalar_lea.vmem [#allocation12], 32
    %899 = vst [vmem:[%s898] sm:$0xff] %v897
    %s900 = scalar_lea.vmem [#allocation3], 120
    %v901 = vld [vmem:[%s900] sm:$0xff]
    %v902 = vld [vmem:[%s900 + $0x8] sm:$0xff]
    %v903 = vld [vmem:[%s900 + $0x10] sm:$0xff]
    %904 = vmatpush.msra.mxu0 %v141
    %905 = vmatpush.msra.mxu0 %v138
    %906 = vmatpush.msra.mxu0 %v135
    %907 = vmatpush.msra.mxu0 %v132
    %908 = vmatpush.msra.mxu0 %v129
    %909 = vmatpush.msra.mxu0 %v126
    %910 = vmatpush.msra.mxu0 %v123
    %911 = vmatpush.msra.mxu0 %v120
    %912 = vmatpush.msra.mxu0 %v117
    %913 = vmatpush.msra.mxu0 %v114
    %914 = vmatpush.msra.mxu0 %v111
    %915 = vmatpush.msra.mxu0 %v108
    %916 = vmatpush.msra.mxu0 %v105
    %917 = vmatpush.msra.mxu0 %v102
    %918 = vmatpush.msra.mxu0 %v99
    %919 = vmatpush.msra.mxu0 %v96
    %920 = vmatmul.f32.gmra.mxu0 %v897
    %v921 = vpop.f32.mrf.mxu0
    %v922 = vadd.f32 0.0, %v921
    %923 = vdwg.mxu0
    %924 = vmatpush.msra.mxu0 %v142
    %925 = vmatpush.msra.mxu0 %v139
    %926 = vmatpush.msra.mxu0 %v136
    %927 = vmatpush.msra.mxu0 %v133
    %928 = vmatpush.msra.mxu0 %v130
    %929 = vmatpush.msra.mxu0 %v127
    %930 = vmatpush.msra.mxu0 %v124
    %931 = vmatpush.msra.mxu0 %v121
    %932 = vmatpush.msra.mxu0 %v118
    %933 = vmatpush.msra.mxu0 %v115
    %934 = vmatpush.msra.mxu0 %v112
    %935 = vmatpush.msra.mxu0 %v109
    %936 = vmatpush.msra.mxu0 %v106
    %937 = vmatpush.msra.mxu0 %v103
    %938 = vmatpush.msra.mxu0 %v100
    %939 = vmatpush.msra.mxu0 %v97
    %940 = vmatmul.f32.gmra.mxu0 %v897
    %v941 = vpop.f32.mrf.mxu0
    %v942 = vadd.f32 0.0, %v941
    %943 = vdwg.mxu0
    %944 = vmatpush.msra.mxu0 %v143
    %945 = vmatpush.msra.mxu0 %v140
    %946 = vmatpush.msra.mxu0 %v137
    %947 = vmatpush.msra.mxu0 %v134
    %948 = vmatpush.msra.mxu0 %v131
    %949 = vmatpush.msra.mxu0 %v128
    %950 = vmatpush.msra.mxu0 %v125
    %951 = vmatpush.msra.mxu0 %v122
    %952 = vmatpush.msra.mxu0 %v119
    %953 = vmatpush.msra.mxu0 %v116
    %954 = vmatpush.msra.mxu0 %v113
    %955 = vmatpush.msra.mxu0 %v110
    %956 = vmatpush.msra.mxu0 %v107
    %957 = vmatpush.msra.mxu0 %v104
    %958 = vmatpush.msra.mxu0 %v101
    %959 = vmatpush.msra.mxu0 %v98
    %960 = vmatmul.f32.gmra.mxu0 %v897
    %v961 = vpop.f32.mrf.mxu0
    %v962 = vadd.f32 0.0, %v961
    %963 = vdwg.mxu0
    %v964 = vadd.f32 %v901, %v922
    %v965 = vadd.f32 %v902, %v942
    %v966 = vxor.u32 %v964, 2147483648
    %v967 = vxor.u32 %v965, 2147483648
    %v968 = vmul.f32 %v966, 1.442695
    %v969 = vpow.pop %v968
    %v970 = vmul.f32 %v967, 1.442695
    %v971 = vpow.pop %v970
    %v972 = vadd.f32 %v969, 1.0
    %v973 = vadd.f32 %v971, 1.0
    %v974 = vrcp.pop %v972
    %v975 = vmul.f32 %v972, %v974
    %v976 = vsub.f32 1.0, %v975
    %v977 = vmul.f32 %v974, %v976
    %v978 = vadd.f32 %v974, %v977
    %vm979 = vweird.f32 %v972
    %vm980 = vweird.f32 %v974
    %vm981 = vmor %vm979, %vm980
    %v982 = vsel %vm981, %v974, %v978
    %v983 = vand.u32 2147483647, %v972
    %vm984 = vcmp.eq.f32.partialorder %v983, 8.507059e+37
    %v985 = vand.u32 %v972, 2147483648
    %v986 = vor.u32 1.1754944e-38, %v985
    %v987 = vsel %vm984, %v986, %v982
    %v988 = vmul.f32 1.0, %v987
    %v989 = vrcp.pop %v973
    %v990 = vmul.f32 %v973, %v989
    %v991 = vsub.f32 1.0, %v990
    %v992 = vmul.f32 %v989, %v991
    %v993 = vadd.f32 %v989, %v992
    %vm994 = vweird.f32 %v973
    %vm995 = vweird.f32 %v989
    %vm996 = vmor %vm994, %vm995
    %v997 = vsel %vm996, %v989, %v993
    %v998 = vand.u32 2147483647, %v973
    %vm999 = vcmp.eq.f32.partialorder %v998, 8.507059e+37
    %v1000 = vand.u32 %v973, 2147483648
    %v1001 = vor.u32 1.1754944e-38, %v1000
    %v1002 = vsel %vm999, %v1001, %v997
    %v1003 = vmul.f32 1.0, %v1002
    %v1004 = vadd.f32 %v962, %v438
    %v1005 = vmul.f32 %v988, %v1004
    %v1006 = vadd.f32 %v903, %v1005
    %v1007 = vtanh.pop %v1006
    %v1008 = vsub.f32 %v897, %v1007
    %v1009 = vmul.f32 %v1003, %v1008
    %v1010 = vadd.f32 %v1007, %v1009
    %s1011 = scalar_lea.vmem [#allocation12], 40
    %1012 = vst [vmem:[%s1011] sm:$0xff] %v1010
    %s1013 = scalar_lea.vmem [#allocation3], 144
    %v1014 = vld [vmem:[%s1013] sm:$0xff]
    %v1015 = vld [vmem:[%s1013 + $0x8] sm:$0xff]
    %v1016 = vld [vmem:[%s1013 + $0x10] sm:$0xff]
    %1017 = vmatpush.msra.mxu0 %v141
    %1018 = vmatpush.msra.mxu0 %v138
    %1019 = vmatpush.msra.mxu0 %v135
    %1020 = vmatpush.msra.mxu0 %v132
    %1021 = vmatpush.msra.mxu0 %v129
    %1022 = vmatpush.msra.mxu0 %v126
    %1023 = vmatpush.msra.mxu0 %v123
    %1024 = vmatpush.msra.mxu0 %v120
    %1025 = vmatpush.msra.mxu0 %v117
    %1026 = vmatpush.msra.mxu0 %v114
    %1027 = vmatpush.msra.mxu0 %v111
    %1028 = vmatpush.msra.mxu0 %v108
    %1029 = vmatpush.msra.mxu0 %v105
    %1030 = vmatpush.msra.mxu0 %v102
    %1031 = vmatpush.msra.mxu0 %v99
    %1032 = vmatpush.msra.mxu0 %v96
    %1033 = vmatmul.f32.gmra.mxu0 %v1010
    %v1034 = vpop.f32.mrf.mxu0
    %v1035 = vadd.f32 0.0, %v1034
    %1036 = vdwg.mxu0
    %1037 = vmatpush.msra.mxu0 %v142
    %1038 = vmatpush.msra.mxu0 %v139
    %1039 = vmatpush.msra.mxu0 %v136
    %1040 = vmatpush.msra.mxu0 %v133
    %1041 = vmatpush.msra.mxu0 %v130
    %1042 = vmatpush.msra.mxu0 %v127
    %1043 = vmatpush.msra.mxu0 %v124
    %1044 = vmatpush.msra.mxu0 %v121
    %1045 = vmatpush.msra.mxu0 %v118
    %1046 = vmatpush.msra.mxu0 %v115
    %1047 = vmatpush.msra.mxu0 %v112
    %1048 = vmatpush.msra.mxu0 %v109
    %1049 = vmatpush.msra.mxu0 %v106
    %1050 = vmatpush.msra.mxu0 %v103
    %1051 = vmatpush.msra.mxu0 %v100
    %1052 = vmatpush.msra.mxu0 %v97
    %1053 = vmatmul.f32.gmra.mxu0 %v1010
    %v1054 = vpop.f32.mrf.mxu0
    %v1055 = vadd.f32 0.0, %v1054
    %1056 = vdwg.mxu0
    %1057 = vmatpush.msra.mxu0 %v143
    %1058 = vmatpush.msra.mxu0 %v140
    %1059 = vmatpush.msra.mxu0 %v137
    %1060 = vmatpush.msra.mxu0 %v134
    %1061 = vmatpush.msra.mxu0 %v131
    %1062 = vmatpush.msra.mxu0 %v128
    %1063 = vmatpush.msra.mxu0 %v125
    %1064 = vmatpush.msra.mxu0 %v122
    %1065 = vmatpush.msra.mxu0 %v119
    %1066 = vmatpush.msra.mxu0 %v116
    %1067 = vmatpush.msra.mxu0 %v113
    %1068 = vmatpush.msra.mxu0 %v110
    %1069 = vmatpush.msra.mxu0 %v107
    %1070 = vmatpush.msra.mxu0 %v104
    %1071 = vmatpush.msra.mxu0 %v101
    %1072 = vmatpush.msra.mxu0 %v98
    %1073 = vmatmul.f32.gmra.mxu0 %v1010
    %v1074 = vpop.f32.mrf.mxu0
    %v1075 = vadd.f32 0.0, %v1074
    %1076 = vdwg.mxu0
    %v1077 = vadd.f32 %v1014, %v1035
    %v1078 = vadd.f32 %v1015, %v1055
    %v1079 = vxor.u32 %v1077, 2147483648
    %v1080 = vxor.u32 %v1078, 2147483648
    %v1081 = vmul.f32 %v1079, 1.442695
    %v1082 = vpow.pop %v1081
    %v1083 = vmul.f32 %v1080, 1.442695
    %v1084 = vpow.pop %v1083
    %v1085 = vadd.f32 %v1082, 1.0
    %v1086 = vadd.f32 %v1084, 1.0
    %v1087 = vrcp.pop %v1085
    %v1088 = vmul.f32 %v1085, %v1087
    %v1089 = vsub.f32 1.0, %v1088
    %v1090 = vmul.f32 %v1087, %v1089
    %v1091 = vadd.f32 %v1087, %v1090
    %vm1092 = vweird.f32 %v1085
    %vm1093 = vweird.f32 %v1087
    %vm1094 = vmor %vm1092, %vm1093
    %v1095 = vsel %vm1094, %v1087, %v1091
    %v1096 = vand.u32 2147483647, %v1085
    %vm1097 = vcmp.eq.f32.partialorder %v1096, 8.507059e+37
    %v1098 = vand.u32 %v1085, 2147483648
    %v1099 = vor.u32 1.1754944e-38, %v1098
    %v1100 = vsel %vm1097, %v1099, %v1095
    %v1101 = vmul.f32 1.0, %v1100
    %v1102 = vrcp.pop %v1086
    %v1103 = vmul.f32 %v1086, %v1102
    %v1104 = vsub.f32 1.0, %v1103
    %v1105 = vmul.f32 %v1102, %v1104
    %v1106 = vadd.f32 %v1102, %v1105
    %vm1107 = vweird.f32 %v1086
    %vm1108 = vweird.f32 %v1102
    %vm1109 = vmor %vm1107, %vm1108
    %v1110 = vsel %vm1109, %v1102, %v1106
    %v1111 = vand.u32 2147483647, %v1086
    %vm1112 = vcmp.eq.f32.partialorder %v1111, 8.507059e+37
    %v1113 = vand.u32 %v1086, 2147483648
    %v1114 = vor.u32 1.1754944e-38, %v1113
    %v1115 = vsel %vm1112, %v1114, %v1110
    %v1116 = vmul.f32 1.0, %v1115
    %v1117 = vadd.f32 %v1075, %v438
    %v1118 = vmul.f32 %v1101, %v1117
    %v1119 = vadd.f32 %v1016, %v1118
    %v1120 = vtanh.pop %v1119
    %v1121 = vsub.f32 %v1010, %v1120
    %v1122 = vmul.f32 %v1116, %v1121
    %v1123 = vadd.f32 %v1120, %v1122
    %s1124 = scalar_lea.vmem [#allocation12], 48
    %1125 = vst [vmem:[%s1124] sm:$0xff] %v1123
    %s1126 = scalar_lea.vmem [#allocation3], 168
    %v1127 = vld [vmem:[%s1126] sm:$0xff]
    %v1128 = vld [vmem:[%s1126 + $0x8] sm:$0xff]
    %v1129 = vld [vmem:[%s1126 + $0x10] sm:$0xff]
    %1130 = vmatpush.msra.mxu0 %v141
    %1131 = vmatpush.msra.mxu0 %v138
    %1132 = vmatpush.msra.mxu0 %v135
    %1133 = vmatpush.msra.mxu0 %v132
    %1134 = vmatpush.msra.mxu0 %v129
    %1135 = vmatpush.msra.mxu0 %v126
    %1136 = vmatpush.msra.mxu0 %v123
    %1137 = vmatpush.msra.mxu0 %v120
    %1138 = vmatpush.msra.mxu0 %v117
    %1139 = vmatpush.msra.mxu0 %v114
    %1140 = vmatpush.msra.mxu0 %v111
    %1141 = vmatpush.msra.mxu0 %v108
    %1142 = vmatpush.msra.mxu0 %v105
    %1143 = vmatpush.msra.mxu0 %v102
    %1144 = vmatpush.msra.mxu0 %v99
    %1145 = vmatpush.msra.mxu0 %v96
    %1146 = vmatmul.f32.gmra.mxu0 %v1123
    %v1147 = vpop.f32.mrf.mxu0
    %v1148 = vadd.f32 0.0, %v1147
    %1149 = vdwg.mxu0
    %1150 = vmatpush.msra.mxu0 %v142
    %1151 = vmatpush.msra.mxu0 %v139
    %1152 = vmatpush.msra.mxu0 %v136
    %1153 = vmatpush.msra.mxu0 %v133
    %1154 = vmatpush.msra.mxu0 %v130
    %1155 = vmatpush.msra.mxu0 %v127
    %1156 = vmatpush.msra.mxu0 %v124
    %1157 = vmatpush.msra.mxu0 %v121
    %1158 = vmatpush.msra.mxu0 %v118
    %1159 = vmatpush.msra.mxu0 %v115
    %1160 = vmatpush.msra.mxu0 %v112
    %1161 = vmatpush.msra.mxu0 %v109
    %1162 = vmatpush.msra.mxu0 %v106
    %1163 = vmatpush.msra.mxu0 %v103
    %1164 = vmatpush.msra.mxu0 %v100
    %1165 = vmatpush.msra.mxu0 %v97
    %1166 = vmatmul.f32.gmra.mxu0 %v1123
    %v1167 = vpop.f32.mrf.mxu0
    %v1168 = vadd.f32 0.0, %v1167
    %1169 = vdwg.mxu0
    %1170 = vmatpush.msra.mxu0 %v143
    %1171 = vmatpush.msra.mxu0 %v140
    %1172 = vmatpush.msra.mxu0 %v137
    %1173 = vmatpush.msra.mxu0 %v134
    %1174 = vmatpush.msra.mxu0 %v131
    %1175 = vmatpush.msra.mxu0 %v128
    %1176 = vmatpush.msra.mxu0 %v125
    %1177 = vmatpush.msra.mxu0 %v122
    %1178 = vmatpush.msra.mxu0 %v119
    %1179 = vmatpush.msra.mxu0 %v116
    %1180 = vmatpush.msra.mxu0 %v113
    %1181 = vmatpush.msra.mxu0 %v110
    %1182 = vmatpush.msra.mxu0 %v107
    %1183 = vmatpush.msra.mxu0 %v104
    %1184 = vmatpush.msra.mxu0 %v101
    %1185 = vmatpush.msra.mxu0 %v98
    %1186 = vmatmul.f32.gmra.mxu0 %v1123
    %v1187 = vpop.f32.mrf.mxu0
    %v1188 = vadd.f32 0.0, %v1187
    %1189 = vdwg.mxu0
    %v1190 = vadd.f32 %v1127, %v1148
    %v1191 = vadd.f32 %v1128, %v1168
    %v1192 = vxor.u32 %v1190, 2147483648
    %v1193 = vxor.u32 %v1191, 2147483648
    %v1194 = vmul.f32 %v1192, 1.442695
    %v1195 = vpow.pop %v1194
    %v1196 = vmul.f32 %v1193, 1.442695
    %v1197 = vpow.pop %v1196
    %v1198 = vadd.f32 %v1195, 1.0
    %v1199 = vadd.f32 %v1197, 1.0
    %v1200 = vrcp.pop %v1198
    %v1201 = vmul.f32 %v1198, %v1200
    %v1202 = vsub.f32 1.0, %v1201
    %v1203 = vmul.f32 %v1200, %v1202
    %v1204 = vadd.f32 %v1200, %v1203
    %vm1205 = vweird.f32 %v1198
    %vm1206 = vweird.f32 %v1200
    %vm1207 = vmor %vm1205, %vm1206
    %v1208 = vsel %vm1207, %v1200, %v1204
    %v1209 = vand.u32 2147483647, %v1198
    %vm1210 = vcmp.eq.f32.partialorder %v1209, 8.507059e+37
    %v1211 = vand.u32 %v1198, 2147483648
    %v1212 = vor.u32 1.1754944e-38, %v1211
    %v1213 = vsel %vm1210, %v1212, %v1208
    %v1214 = vmul.f32 1.0, %v1213
    %v1215 = vrcp.pop %v1199
    %v1216 = vmul.f32 %v1199, %v1215
    %v1217 = vsub.f32 1.0, %v1216
    %v1218 = vmul.f32 %v1215, %v1217
    %v1219 = vadd.f32 %v1215, %v1218
    %vm1220 = vweird.f32 %v1199
    %vm1221 = vweird.f32 %v1215
    %vm1222 = vmor %vm1220, %vm1221
    %v1223 = vsel %vm1222, %v1215, %v1219
    %v1224 = vand.u32 2147483647, %v1199
    %vm1225 = vcmp.eq.f32.partialorder %v1224, 8.507059e+37
    %v1226 = vand.u32 %v1199, 2147483648
    %v1227 = vor.u32 1.1754944e-38, %v1226
    %v1228 = vsel %vm1225, %v1227, %v1223
    %v1229 = vmul.f32 1.0, %v1228
    %v1230 = vadd.f32 %v1188, %v438
    %v1231 = vmul.f32 %v1214, %v1230
    %v1232 = vadd.f32 %v1129, %v1231
    %v1233 = vtanh.pop %v1232
    %v1234 = vsub.f32 %v1123, %v1233
    %v1235 = vmul.f32 %v1229, %v1234
    %v1236 = vadd.f32 %v1233, %v1235
    %s1237 = scalar_lea.vmem [#allocation12], 56
    %1238 = vst [vmem:[%s1237] sm:$0xff] %v1236
    %p1239 = scmp.lt.s32.totalorder 0, 0
    // Predicated region
    $region42: #{tpu_custom_call.1} parent=1 // pred_check
      %p1240 = pneg %p1239
    $region43: #{tpu_custom_call.1} parent=1 // pred_check_branch
      %1242 = sbr.rel (%p1240) target = $region45
    $region44: #{tpu_custom_call.1} parent=1 // pred_region
      %1243 = vst [vmem:[#allocation2] sm:$0xff] %v1236
    $region45: #{tpu_custom_call.1} parent=1 // pred_fallthru
      _
    // Predicated region
    $region46: #{tpu_custom_call.1} parent=1 // pred_check
      %p1244 = pneg %p85
    $region47: #{tpu_custom_call.1} parent=1 // pred_check_branch
      %1246 = sbr.rel (%p1244) target = $region49
    $region48: #{tpu_custom_call.1} parent=1 // pred_region
      %1247 = vst [vmem:[#allocation13] sm:$0xff] %v1236
    $region49: #{tpu_custom_call.1} parent=1 // pred_fallthru
      _
    // Predicated region
    $region50: #{tpu_custom_call.1} parent=1 // pred_check
      _
    $region51: #{tpu_custom_call.1} parent=1 // pred_check_branch
      %1249 = sbr.rel (0) target = $region53
    $region52: #{tpu_custom_call.1} parent=1 // pred_region
      %1251 = vsyncadd [#allocation6], 0
      %s1252 = sshll.u32 [#allocation12], 4
      %s1253 = int_to_ptr.vmem [resolvable:$true] %s1252
      %s1254 = sshll.u32 %s5, 4
      %s1255 = int_to_ptr.hbm [resolvable:$true] %s1254
      %1260 = dma.vmem_to_hbm [thread:$0]  %s1253, 1024, %s1255, [#allocation6], 128, 128, 8
    $region53: #{tpu_custom_call.1} parent=1 // pred_fallthru
      _
    // Predicated region
    $region54: #{tpu_custom_call.1} parent=1 // pred_check
      _
    $region55: #{tpu_custom_call.1} parent=1 // pred_check_branch
      %1262 = sbr.rel (0) target = $region57
    $region56: #{tpu_custom_call.1} parent=1 // pred_region
      %1264 = vsyncadd [#allocation14], 0
      %s1266 = sshll.u32 [#allocation13], 4
      %s1267 = int_to_ptr.vmem [resolvable:$true] %s1266
      %s1268 = sshll.u32 %s6, 4
      %s1269 = int_to_ptr.hbm [resolvable:$true] %s1268
      %1271 = dma.vmem_to_hbm [thread:$0]  %s1267, 128, %s1269, [#allocation14]
    $region57: #{tpu_custom_call.1} parent=1 // pred_fallthru
      _
    // Predicated region
    $region58: #{tpu_custom_call.1} parent=1 // pred_check
      _
    $region59: #{tpu_custom_call.1} parent=1 // pred_check_branch
      %1273 = sbr.rel (0) target = $region61
    $region60: #{tpu_custom_call.1} parent=1 // pred_region
      %1275 = dma.done [#allocation6], 1024
    $region61: #{tpu_custom_call.1} parent=1 // pred_fallthru
      _
    // Predicated region
    $region62: #{tpu_custom_call.1} parent=1 // pred_check
      _
    $region63: #{tpu_custom_call.1} parent=1 // pred_check_branch
      %1277 = sbr.rel (0) target = $region65
    $region64: #{tpu_custom_call.1} parent=1 // pred_region
      %1279 = dma.done [#allocation14], 128
    $region65: #{tpu_custom_call.1} parent=1 // pred_fallthru
      _
    %1280 = vsyncpa [#allocation5], 1
    %1281 = vsyncpa [#allocation8], 1
    %1282 = vsyncpa [#allocation11], 1
    %1283 = vsyncpa [#allocation6], 1
    %1284 = vsyncpa [#allocation14], 1

</llo_original>
